<compile_context>
chip_gen: v6e
topology: v6e:2x2x1
jax: 0.10.0
libtpu: 0.0.40
codegen_flags: <defaults>
</compile_context>

<pallas_src>
import functools

import jax
import jax.numpy as jnp
import numpy as np
from jax.experimental import pallas as pl
from jax.experimental.pallas import tpu as pltpu


# ----------------------------- fused ScRNN kernel ---------------------------

def _scrnn_kernel(x_ref, wbig_ref, whh_ref, b_ref, m_ref, wlin_ref, blin_ref,
                  out_ref, g_scr, h_scr, *, T, B, H):
    """Shapes (B = sublane-padded batch, H2 = 2H, gate cols packed as
    [i_f i_b | f_f f_b | o_f o_b | g_f g_b]):
      x_ref   : (T*B, 2D)   bf16  time-major rows, cols = [x(t) | x(T-1-t)]
      wbig_ref: (2D, 8H)    bf16  rows 0:D fwd input W, rows D:2D bwd input W
      whh_ref : (2H, 8H)    bf16  block recurrent weight (same gate col order)
      b_ref   : (1, 8H)     f32   b_ih + b_hh
      m_ref   : (T*B, 2H)   f32   length mask: fwd cols [:H] at time t,
                                  bwd cols [H:] at time T-1-t (1.0 = valid)
      wlin_ref: (2H, Opad)  bf16  Linear weight^T (lane-padded)
      blin_ref: (1, Opad)   f32
      out_ref : (T*B, Opad) f32   time-major rows
      g_scr   : (T*B, 8H)   f32   gate pre-activation slab
      h_scr   : (T*B, 2H)   bf16  masked hidden states [fwd | bwd]
    """
    H2 = 2 * H

    # (1) Hoisted input projection for BOTH directions (backward half already
    #     time-reversed via the [x | x_rev] input): one MXU GEMM, f32 acc.
    g_scr[...] = (jnp.dot(x_ref[...], wbig_ref[...],
                          preferred_element_type=jnp.float32) + b_ref[...])

    whh = whh_ref[...]                       # hoisted recurrent RHS (2H, 8H)
    m_all = m_ref[...] > 0.5                 # (T*B, 2H) bool, computed once

    h = jnp.zeros((B, H2), jnp.float32)      # [h_fwd | h_bwd]
    c = jnp.zeros((B, H2), jnp.float32)

    # (2) Fully-unrolled serial recurrence; per step: one contiguous (B, 8H)
    #     gate-slab load, one (B, 2H)x(2H, 8H) GEMM, one sigmoid slab (B, 6H),
    #     two tanh slabs (B, 2H).
    for s in range(T):
        r0 = s * B
        gates = g_scr[r0:r0 + B, :] + jnp.dot(
            h.astype(jnp.bfloat16), whh, preferred_element_type=jnp.float32)

        act = jax.nn.sigmoid(gates[:, 0:6 * H])          # [i | f | o]
        i_g = act[:, 0:H2]
        f_g = act[:, H2:2 * H2]
        o_g = act[:, 2 * H2:3 * H2]
        g_g = jnp.tanh(gates[:, 6 * H:8 * H])            # [g_f | g_b]

        c_new = f_g * c + i_g * g_g
        h_new = o_g * jnp.tanh(c_new)

        m = m_all[r0:r0 + B, :]
        c = jnp.where(m, c_new, c)
        h = jnp.where(m, h_new, h)
        h_out = jnp.where(m, h_new, 0.0).astype(jnp.bfloat16)

        h_scr[r0:r0 + B, 0:H] = h_out[:, 0:H]            # fwd @ time s
        rb = (T - 1 - s) * B
        h_scr[rb:rb + B, H:H2] = h_out[:, H:H2]          # bwd @ time T-1-s

    # (3) Fused output Linear: single lane-dense (T*B, 2H) x (2H, Opad) GEMM.
    out_ref[...] = (jnp.dot(h_scr[...], wlin_ref[...],
                            preferred_element_type=jnp.float32)
                    + blin_ref[...]).astype(out_ref.dtype)


# ----------------------------- ScRNN forward -------------------------------

def scrnn_forward(x, lens, params):
    """x: (B, T, 3*char_vocab_size) f32, lens: (B,) int (descending,
    max(lens) == T).  Returns (B, output_dim, T) like the PyTorch module."""
    B, T, D = x.shape
    H = params["whh_blk"].shape[0] // 2
    O_pad = params["w_lin_t"].shape[1]
    O = params["w_lin"].shape[0]
    B_pad = ((B + 7) // 8) * 8                 # sublane-align the batch

    # Pad batch rows with zeros and length 0 (fully masked, sliced off later).
    x_p = jnp.zeros((B_pad, T, D), x.dtype).at[:B].set(x)
    lens_p = jnp.zeros((B_pad,), jnp.int32).at[:B].set(lens.astype(jnp.int32))

    # Time-major [x | time-reversed x] so one GEMM fills both gate halves.
    x_tm = jnp.transpose(x_p, (1, 0, 2))                   # (T, B_pad, D)
    x_cat = jnp.concatenate([x_tm, x_tm[::-1]], axis=-1)
    x_cat = x_cat.reshape(T * B_pad, 2 * D).astype(jnp.bfloat16)

    # Precomputed length masks (fwd at time t, bwd at time T-1-t).
    t_ids = jnp.arange(T, dtype=jnp.int32)[:, None]        # (T, 1)
    m_f = (t_ids < lens_p[None, :]).astype(jnp.float32)    # (T, B_pad)
    m_b = ((T - 1 - t_ids) < lens_p[None, :]).astype(jnp.float32)
    mask = jnp.concatenate(
        [jnp.broadcast_to(m_f[..., None], (T, B_pad, H)),
         jnp.broadcast_to(m_b[..., None], (T, B_pad, H))],
        axis=-1).reshape(T * B_pad, 2 * H)

    out_flat = pl.pallas_call(
        functools.partial(_scrnn_kernel, T=T, B=B_pad, H=H),
        out_shape=jax.ShapeDtypeStruct((T * B_pad, O_pad), jnp.float32),
        grid_spec=pltpu.PrefetchScalarGridSpec(
            num_scalar_prefetch=0,
            grid=(1,),
            in_specs=[
                pl.BlockSpec((T * B_pad, 2 * D), lambda i: (0, 0)),  # x|x_rev
                pl.BlockSpec((2 * D, 8 * H), lambda i: (0, 0)),      # W_in
                pl.BlockSpec((2 * H, 8 * H), lambda i: (0, 0)),      # W_hh
                pl.BlockSpec((1, 8 * H), lambda i: (0, 0)),          # bias
                pl.BlockSpec((T * B_pad, 2 * H), lambda i: (0, 0)),  # mask
                pl.BlockSpec((2 * H, O_pad), lambda i: (0, 0)),      # W_lin^T
                pl.BlockSpec((1, O_pad), lambda i: (0, 0)),          # b_lin
            ],
            out_specs=pl.BlockSpec((T * B_pad, O_pad), lambda i: (0, 0)),
            scratch_shapes=[
                pltpu.VMEM((T * B_pad, 8 * H), jnp.float32),    # gate slab
                pltpu.VMEM((T * B_pad, 2 * H), jnp.bfloat16),   # hidden slab
            ],
        ),
        compiler_params=pltpu.CompilerParams(
            dimension_semantics=("arbitrary",)),
    )(x_cat, params["w_big"], params["whh_blk"], params["b_cat"], mask,
      params["w_lin_t"], params["b_lin_pad"])

    # (T*B_pad, O_pad) -> (T, B_pad, O_pad) -> slice pads -> (B, O, T)
    out = out_flat.reshape(T, B_pad, O_pad)[:, :B, :O]
    return jnp.transpose(out, (1, 2, 0))


# ----------------------------- params & reference --------------------------

def init_params(key, char_vocab_size, hdim, output_dim):
    D = 3 * char_vocab_size
    H = hdim
    o_pad = ((output_dim + 127) // 128) * 128
    std = 1.0 / float(H) ** 0.5
    ks = jax.random.split(key, 10)
    u = lambda k, s: jax.random.uniform(k, s, jnp.float32, -std, std)
    wih_f, whh_f = u(ks[0], (4 * H, D)), u(ks[1], (4 * H, H))
    bih_f, bhh_f = u(ks[2], (4 * H,)), u(ks[3], (4 * H,))
    wih_b, whh_b = u(ks[4], (4 * H, D)), u(ks[5], (4 * H, H))
    bih_b, bhh_b = u(ks[6], (4 * H,)), u(ks[7], (4 * H,))
    w_lin, b_lin = u(ks[8], (output_dim, 2 * H)), u(ks[9], (output_dim,))

    # Packed gate-column order: [i_f i_b | f_f f_b | o_f o_b | g_f g_b].
    # PyTorch per-direction row order in W_ih / W_hh / biases is i, f, g, o.
    src = {"i": 0, "f": 1, "g": 2, "o": 3}
    dst = [("i", 0), ("f", 2), ("o", 4), ("g", 6)]   # fwd at dst, bwd at dst+1

    def col(w_t, gate):                              # (R, 4H) -> (R, H) block
        s0 = src[gate] * H
        return w_t[:, s0:s0 + H]

    w_big = jnp.zeros((2 * D, 8 * H), jnp.float32)
    whh_blk = jnp.zeros((2 * H, 8 * H), jnp.float32)
    b_cat = jnp.zeros((8 * H,), jnp.float32)
    bf, bb = bih_f + bhh_f, bih_b + bhh_b
    for gate, d in dst:
        cf, cb = d * H, (d + 1) * H
        w_big = w_big.at[0:D, cf:cf + H].set(col(wih_f.T, gate))
        w_big = w_big.at[D:2 * D, cb:cb + H].set(col(wih_b.T, gate))
        whh_blk = whh_blk.at[0:H, cf:cf + H].set(col(whh_f.T, gate))
        whh_blk = whh_blk.at[H:2 * H, cb:cb + H].set(col(whh_b.T, gate))
        s0 = src[gate] * H
        b_cat = b_cat.at[cf:cf + H].set(bf[s0:s0 + H])
        b_cat = b_cat.at[cb:cb + H].set(bb[s0:s0 + H])

    w_lin_t = jnp.zeros((2 * H, o_pad), jnp.float32)
    w_lin_t = w_lin_t.at[:, :output_dim].set(w_lin.T)
    b_lin_pad = jnp.zeros((1, o_pad), jnp.float32).at[0, :output_dim].set(b_lin)

    return {
        # fused, kernel-layout parameters (bf16 matmul operands, f32 biases)
        "w_big": w_big.astype(jnp.bfloat16),        # (2D, 8H)
        "whh_blk": whh_blk.astype(jnp.bfloat16),    # (2H, 8H)
        "b_cat": b_cat.reshape(1, -1),              # (1, 8H)
        "w_lin_t": w_lin_t.astype(jnp.bfloat16),    # (2H, O_pad)
        "b_lin_pad": b_lin_pad,                     # (1, O_pad)
        # PyTorch-layout f32 copies for the pure-JAX reference
        "wih_f": wih_f, "whh_f": whh_f, "bih_f": bih_f, "bhh_f": bhh_f,
        "wih_b": wih_b, "whh_b": whh_b, "bih_b": bih_b, "bhh_b": bhh_b,
        "w_lin": w_lin, "b_lin": b_lin,
    }


def ref_forward(x, lens, p):
    """Pure-JAX reference for ScRNN.forward with the same mixed-precision
    semantics as the kernel (bf16 matmul operands, f32 accumulation/state)."""
    r = lambda a: a.astype(jnp.bfloat16).astype(jnp.float32)
    B, T, _ = x.shape
    H = p["whh_f"].shape[1]
    xb = r(x)

    def run(reverse, wih, whh, bih, bhh):
        wih, whh = r(wih), r(whh)
        h = jnp.zeros((B, H), jnp.float32)
        c = jnp.zeros((B, H), jnp.float32)
        outs = [None] * T
        order = range(T - 1, -1, -1) if reverse else range(T)
        for t in order:
            gates = xb[:, t] @ wih.T + r(h) @ whh.T + bih + bhh
            i = jax.nn.sigmoid(gates[:, :H])
            f = jax.nn.sigmoid(gates[:, H:2 * H])
            g = jnp.tanh(gates[:, 2 * H:3 * H])
            o = jax.nn.sigmoid(gates[:, 3 * H:])
            cn = f * c + i * g
            hn = o * jnp.tanh(cn)
            m = (t < lens)[:, None]
            h = jnp.where(m, hn, h)
            c = jnp.where(m, cn, c)
            outs[t] = jnp.where(m, hn, 0.0)
        return jnp.stack(outs, axis=1)                 # (B, T, H)

    hf = run(False, p["wih_f"], p["whh_f"], p["bih_f"], p["bhh_f"])
    hb = run(True, p["wih_b"], p["whh_b"], p["bih_b"], p["bhh_b"])
    hcat = jnp.concatenate([hf, hb], axis=-1)          # (B, T, 2H)
    out = r(hcat) @ r(p["w_lin"]).T + p["b_lin"]
    return jnp.transpose(out, (0, 2, 1))               # (B, O, T)


# ----------------------------- main -----------------------------------------

if __name__ == "__main__":
    B, T = 2, 8
    char_vocab_size, hdim, output_dim = 20, 32, 16     # D = 60

    key = jax.random.PRNGKey(0)
    kx, kp = jax.random.split(key)
    x = jax.random.normal(kx, (B, T, 3 * char_vocab_size), jnp.float32)
    # pack_padded_sequence requires descending lengths; max(lens) == T
    lens = jnp.array([8, 5], jnp.int32)
    params = init_params(kp, char_vocab_size, hdim, output_dim)

    out = scrnn_forward(x, lens, params)
    out = jax.block_until_ready(out)

    assert out.shape == (B, output_dim, T)
    ref = ref_forward(x, lens, params)
    np.testing.assert_allclose(np.asarray(out), np.asarray(ref),
                               rtol=2e-3, atol=2e-3)
    print("KERNEL_OK")
</pallas_src>

<mosaic_0001>
module attributes {stable_mosaic.version = 11 : i64} {
  func.func @_scrnn_kernel(%arg0: i32, %arg1: memref<64x120xbf16, #tpu.memory_space<vmem>>, %arg2: memref<120x256xbf16, #tpu.memory_space<vmem>>, %arg3: memref<64x256xbf16, #tpu.memory_space<vmem>>, %arg4: memref<1x256xf32, #tpu.memory_space<vmem>>, %arg5: memref<64x64xf32, #tpu.memory_space<vmem>>, %arg6: memref<64x128xbf16, #tpu.memory_space<vmem>>, %arg7: memref<1x128xf32, #tpu.memory_space<vmem>>, %arg8: memref<64x128xf32, #tpu.memory_space<vmem>>, %arg9: memref<64x256xf32, #tpu.memory_space<vmem>>, %arg10: memref<64x64xbf16, #tpu.memory_space<vmem>>) attributes {dimension_semantics = [#tpu.dimension_semantics<arbitrary>], iteration_bounds = array<i64: 1>, scalar_prefetch = 0 : i64, scratch_operands = 2 : i64, tpu.core_type = #tpu.core_type<tc>, window_params = [{pipeline_mode = #tpu.pipeline_mode<synchronous>, transform_indices = @transform_0, window_bounds = array<i64: 64, 120>}, {pipeline_mode = #tpu.pipeline_mode<synchronous>, transform_indices = @transform_1, window_bounds = array<i64: 120, 256>}, {pipeline_mode = #tpu.pipeline_mode<synchronous>, transform_indices = @transform_2, window_bounds = array<i64: 64, 256>}, {pipeline_mode = #tpu.pipeline_mode<synchronous>, transform_indices = @transform_3, window_bounds = array<i64: 1, 256>}, {pipeline_mode = #tpu.pipeline_mode<synchronous>, transform_indices = @transform_4, window_bounds = array<i64: 64, 64>}, {pipeline_mode = #tpu.pipeline_mode<synchronous>, transform_indices = @transform_5, window_bounds = array<i64: 64, 128>}, {pipeline_mode = #tpu.pipeline_mode<synchronous>, transform_indices = @transform_6, window_bounds = array<i64: 1, 128>}, {pipeline_mode = #tpu.pipeline_mode<synchronous>, transform_indices = @transform_7, window_bounds = array<i64: 64, 128>}]} {
    %c0 = arith.constant 0 : index
    %c0_0 = arith.constant 0 : index
    %0 = vector.load %arg1[%c0, %c0_0] : memref<64x120xbf16, #tpu.memory_space<vmem>>, vector<64x120xbf16>
    %c0_1 = arith.constant 0 : index
    %c0_2 = arith.constant 0 : index
    %1 = vector.load %arg2[%c0_1, %c0_2] : memref<120x256xbf16, #tpu.memory_space<vmem>>, vector<120x256xbf16>
    %cst = arith.constant dense<0.000000e+00> : vector<64x256xf32>
    %2 = tpu.matmul %0, %1, %cst {dimension_numbers = #tpu.dot_dimension_numbers<[1], [0], [0], [1], [0, 0, 1, 1], [], []>} : vector<64x120xbf16>, vector<120x256xbf16>, vector<64x256xf32> -> vector<64x256xf32>
    %c0_3 = arith.constant 0 : index
    %c0_4 = arith.constant 0 : index
    %3 = vector.load %arg4[%c0_3, %c0_4] : memref<1x256xf32, #tpu.memory_space<vmem>>, vector<1x256xf32>
    %4 = vector.broadcast %3 : vector<1x256xf32> to vector<64x256xf32>
    %5 = arith.addf %2, %4 : vector<64x256xf32>
    %c0_5 = arith.constant 0 : index
    %c0_6 = arith.constant 0 : index
    %6 = vector.load %arg9[%c0_5, %c0_6] : memref<64x256xf32, #tpu.memory_space<vmem>>, vector<64x256xf32>
    tpu.vector_store %arg9[%c0_5, %c0_6], %5 {strides = array<i32>} : memref<64x256xf32, #tpu.memory_space<vmem>>, vector<64x256xf32>,
    %c0_7 = arith.constant 0 : index
    %c0_8 = arith.constant 0 : index
    %7 = vector.load %arg3[%c0_7, %c0_8] : memref<64x256xbf16, #tpu.memory_space<vmem>>, vector<64x256xbf16>
    %c0_9 = arith.constant 0 : index
    %c0_10 = arith.constant 0 : index
    %8 = vector.load %arg5[%c0_9, %c0_10] : memref<64x64xf32, #tpu.memory_space<vmem>>, vector<64x64xf32>
    %cst_11 = arith.constant 5.000000e-01 : f32
    %9 = vector.broadcast %cst_11 : f32 to vector<64x64xf32>
    %10 = arith.cmpf ogt, %8, %9 : vector<64x64xf32>
    %cst_12 = arith.constant 0.000000e+00 : f32
    %11 = vector.broadcast %cst_12 : f32 to vector<8x64xf32>
    %cst_13 = arith.constant 0.000000e+00 : f32
    %12 = vector.broadcast %cst_13 : f32 to vector<8x64xf32>
    %c0_14 = arith.constant 0 : index
    %c0_15 = arith.constant 0 : index
    %13 = vector.load %arg9[%c0_14, %c0_15] : memref<64x256xf32, #tpu.memory_space<vmem>>, vector<8x256xf32>
    %14 = arith.truncf %11 : vector<8x64xf32> to vector<8x64xbf16>
    %cst_16 = arith.constant dense<0.000000e+00> : vector<8x256xf32>
    %15 = tpu.matmul %14, %7, %cst_16 {dimension_numbers = #tpu.dot_dimension_numbers<[1], [0], [0], [1], [0, 0, 1, 1], [], []>} : vector<8x64xbf16>, vector<64x256xbf16>, vector<8x256xf32> -> vector<8x256xf32>
    %16 = arith.addf %13, %15 : vector<8x256xf32>
    %17 = vector.extract_strided_slice %16 {offsets = [0, 0], sizes = [8, 192], strides = [1, 1]} : vector<8x256xf32> to vector<8x192xf32>
    %18 = arith.negf %17 : vector<8x192xf32>
    %19 = math.exp %18 : vector<8x192xf32>
    %cst_17 = arith.constant 1.000000e+00 : f32
    %20 = vector.broadcast %cst_17 : f32 to vector<8x192xf32>
    %21 = arith.addf %20, %19 : vector<8x192xf32>
    %22 = arith.divf %20, %21 : vector<8x192xf32>
    %23 = vector.extract_strided_slice %22 {offsets = [0, 0], sizes = [8, 64], strides = [1, 1]} : vector<8x192xf32> to vector<8x64xf32>
    %24 = vector.extract_strided_slice %22 {offsets = [0, 64], sizes = [8, 64], strides = [1, 1]} : vector<8x192xf32> to vector<8x64xf32>
    %25 = vector.extract_strided_slice %22 {offsets = [0, 128], sizes = [8, 64], strides = [1, 1]} : vector<8x192xf32> to vector<8x64xf32>
    %26 = vector.extract_strided_slice %16 {offsets = [0, 192], sizes = [8, 64], strides = [1, 1]} : vector<8x256xf32> to vector<8x64xf32>
    %27 = math.tanh %26 : vector<8x64xf32>
    %28 = arith.mulf %24, %12 : vector<8x64xf32>
    %29 = arith.mulf %23, %27 : vector<8x64xf32>
    %30 = arith.addf %28, %29 : vector<8x64xf32>
    %31 = math.tanh %30 : vector<8x64xf32>
    %32 = arith.mulf %25, %31 : vector<8x64xf32>
    %33 = vector.extract_strided_slice %10 {offsets = [0, 0], sizes = [8, 64], strides = [1, 1]} : vector<64x64xi1> to vector<8x64xi1>
    %34 = arith.select %33, %30, %12 : vector<8x64xi1>, vector<8x64xf32>
    %35 = arith.select %33, %32, %11 : vector<8x64xi1>, vector<8x64xf32>
    %cst_18 = arith.constant 0.000000e+00 : f32
    %36 = vector.broadcast %cst_18 : f32 to vector<8x64xf32>
    %37 = arith.select %33, %32, %36 : vector<8x64xi1>, vector<8x64xf32>
    %38 = arith.truncf %37 : vector<8x64xf32> to vector<8x64xbf16>
    %39 = vector.extract_strided_slice %38 {offsets = [0, 0], sizes = [8, 32], strides = [1, 1]} : vector<8x64xbf16> to vector<8x32xbf16>
    %c0_19 = arith.constant 0 : index
    %c0_20 = arith.constant 0 : index
    %40 = vector.load %arg10[%c0_19, %c0_20] : memref<64x64xbf16, #tpu.memory_space<vmem>>, vector<8x32xbf16>
    tpu.vector_store %arg10[%c0_19, %c0_20], %39 {strides = array<i32>} : memref<64x64xbf16, #tpu.memory_space<vmem>>, vector<8x32xbf16>,
    %41 = vector.extract_strided_slice %38 {offsets = [0, 32], sizes = [8, 32], strides = [1, 1]} : vector<8x64xbf16> to vector<8x32xbf16>
    %c56 = arith.constant 56 : index
    %c32 = arith.constant 32 : index
    %42 = vector.load %arg10[%c56, %c32] : memref<64x64xbf16, #tpu.memory_space<vmem>>, vector<8x32xbf16>
    tpu.vector_store %arg10[%c56, %c32], %41 {strides = array<i32>} : memref<64x64xbf16, #tpu.memory_space<vmem>>, vector<8x32xbf16>,
    %c8 = arith.constant 8 : index
    %c0_21 = arith.constant 0 : index
    %43 = vector.load %arg9[%c8, %c0_21] : memref<64x256xf32, #tpu.memory_space<vmem>>, vector<8x256xf32>
    %44 = arith.truncf %35 : vector<8x64xf32> to vector<8x64xbf16>
    %cst_22 = arith.constant dense<0.000000e+00> : vector<8x256xf32>
    %45 = tpu.matmul %44, %7, %cst_22 {dimension_numbers = #tpu.dot_dimension_numbers<[1], [0], [0], [1], [0, 0, 1, 1], [], []>} : vector<8x64xbf16>, vector<64x256xbf16>, vector<8x256xf32> -> vector<8x256xf32>
    %46 = arith.addf %43, %45 : vector<8x256xf32>
    %47 = vector.extract_strided_slice %46 {offsets = [0, 0], sizes = [8, 192], strides = [1, 1]} : vector<8x256xf32> to vector<8x192xf32>
    %48 = arith.negf %47 : vector<8x192xf32>
    %49 = math.exp %48 : vector<8x192xf32>
    %cst_23 = arith.constant 1.000000e+00 : f32
    %50 = vector.broadcast %cst_23 : f32 to vector<8x192xf32>
    %51 = arith.addf %50, %49 : vector<8x192xf32>
    %52 = arith.divf %50, %51 : vector<8x192xf32>
    %53 = vector.extract_strided_slice %52 {offsets = [0, 0], sizes = [8, 64], strides = [1, 1]} : vector<8x192xf32> to vector<8x64xf32>
    %54 = vector.extract_strided_slice %52 {offsets = [0, 64], sizes = [8, 64], strides = [1, 1]} : vector<8x192xf32> to vector<8x64xf32>
    %55 = vector.extract_strided_slice %52 {offsets = [0, 128], sizes = [8, 64], strides = [1, 1]} : vector<8x192xf32> to vector<8x64xf32>
    %56 = vector.extract_strided_slice %46 {offsets = [0, 192], sizes = [8, 64], strides = [1, 1]} : vector<8x256xf32> to vector<8x64xf32>
    %57 = math.tanh %56 : vector<8x64xf32>
    %58 = arith.mulf %54, %34 : vector<8x64xf32>
    %59 = arith.mulf %53, %57 : vector<8x64xf32>
    %60 = arith.addf %58, %59 : vector<8x64xf32>
    %61 = math.tanh %60 : vector<8x64xf32>
    %62 = arith.mulf %55, %61 : vector<8x64xf32>
    %63 = vector.extract_strided_slice %10 {offsets = [8, 0], sizes = [8, 64], strides = [1, 1]} : vector<64x64xi1> to vector<8x64xi1>
    %64 = arith.select %63, %60, %34 : vector<8x64xi1>, vector<8x64xf32>
    %65 = arith.select %63, %62, %35 : vector<8x64xi1>, vector<8x64xf32>
    %cst_24 = arith.constant 0.000000e+00 : f32
    %66 = vector.broadcast %cst_24 : f32 to vector<8x64xf32>
    %67 = arith.select %63, %62, %66 : vector<8x64xi1>, vector<8x64xf32>
    %68 = arith.truncf %67 : vector<8x64xf32> to vector<8x64xbf16>
    %69 = vector.extract_strided_slice %68 {offsets = [0, 0], sizes = [8, 32], strides = [1, 1]} : vector<8x64xbf16> to vector<8x32xbf16>
    %c8_25 = arith.constant 8 : index
    %c0_26 = arith.constant 0 : index
    %70 = vector.load %arg10[%c8_25, %c0_26] : memref<64x64xbf16, #tpu.memory_space<vmem>>, vector<8x32xbf16>
    tpu.vector_store %arg10[%c8_25, %c0_26], %69 {strides = array<i32>} : memref<64x64xbf16, #tpu.memory_space<vmem>>, vector<8x32xbf16>,
    %71 = vector.extract_strided_slice %68 {offsets = [0, 32], sizes = [8, 32], strides = [1, 1]} : vector<8x64xbf16> to vector<8x32xbf16>
    %c48 = arith.constant 48 : index
    %c32_27 = arith.constant 32 : index
    %72 = vector.load %arg10[%c48, %c32_27] : memref<64x64xbf16, #tpu.memory_space<vmem>>, vector<8x32xbf16>
    tpu.vector_store %arg10[%c48, %c32_27], %71 {strides = array<i32>} : memref<64x64xbf16, #tpu.memory_space<vmem>>, vector<8x32xbf16>,
    %c16 = arith.constant 16 : index
    %c0_28 = arith.constant 0 : index
    %73 = vector.load %arg9[%c16, %c0_28] : memref<64x256xf32, #tpu.memory_space<vmem>>, vector<8x256xf32>
    %74 = arith.truncf %65 : vector<8x64xf32> to vector<8x64xbf16>
    %cst_29 = arith.constant dense<0.000000e+00> : vector<8x256xf32>
    %75 = tpu.matmul %74, %7, %cst_29 {dimension_numbers = #tpu.dot_dimension_numbers<[1], [0], [0], [1], [0, 0, 1, 1], [], []>} : vector<8x64xbf16>, vector<64x256xbf16>, vector<8x256xf32> -> vector<8x256xf32>
    %76 = arith.addf %73, %75 : vector<8x256xf32>
    %77 = vector.extract_strided_slice %76 {offsets = [0, 0], sizes = [8, 192], strides = [1, 1]} : vector<8x256xf32> to vector<8x192xf32>
    %78 = arith.negf %77 : vector<8x192xf32>
    %79 = math.exp %78 : vector<8x192xf32>
    %cst_30 = arith.constant 1.000000e+00 : f32
    %80 = vector.broadcast %cst_30 : f32 to vector<8x192xf32>
    %81 = arith.addf %80, %79 : vector<8x192xf32>
    %82 = arith.divf %80, %81 : vector<8x192xf32>
    %83 = vector.extract_strided_slice %82 {offsets = [0, 0], sizes = [8, 64], strides = [1, 1]} : vector<8x192xf32> to vector<8x64xf32>
    %84 = vector.extract_strided_slice %82 {offsets = [0, 64], sizes = [8, 64], strides = [1, 1]} : vector<8x192xf32> to vector<8x64xf32>
    %85 = vector.extract_strided_slice %82 {offsets = [0, 128], sizes = [8, 64], strides = [1, 1]} : vector<8x192xf32> to vector<8x64xf32>
    %86 = vector.extract_strided_slice %76 {offsets = [0, 192], sizes = [8, 64], strides = [1, 1]} : vector<8x256xf32> to vector<8x64xf32>
    %87 = math.tanh %86 : vector<8x64xf32>
    %88 = arith.mulf %84, %64 : vector<8x64xf32>
    %89 = arith.mulf %83, %87 : vector<8x64xf32>
    %90 = arith.addf %88, %89 : vector<8x64xf32>
    %91 = math.tanh %90 : vector<8x64xf32>
    %92 = arith.mulf %85, %91 : vector<8x64xf32>
    %93 = vector.extract_strided_slice %10 {offsets = [16, 0], sizes = [8, 64], strides = [1, 1]} : vector<64x64xi1> to vector<8x64xi1>
    %94 = arith.select %93, %90, %64 : vector<8x64xi1>, vector<8x64xf32>
    %95 = arith.select %93, %92, %65 : vector<8x64xi1>, vector<8x64xf32>
    %cst_31 = arith.constant 0.000000e+00 : f32
    %96 = vector.broadcast %cst_31 : f32 to vector<8x64xf32>
    %97 = arith.select %93, %92, %96 : vector<8x64xi1>, vector<8x64xf32>
    %98 = arith.truncf %97 : vector<8x64xf32> to vector<8x64xbf16>
    %99 = vector.extract_strided_slice %98 {offsets = [0, 0], sizes = [8, 32], strides = [1, 1]} : vector<8x64xbf16> to vector<8x32xbf16>
    %c16_32 = arith.constant 16 : index
    %c0_33 = arith.constant 0 : index
    %100 = vector.load %arg10[%c16_32, %c0_33] : memref<64x64xbf16, #tpu.memory_space<vmem>>, vector<8x32xbf16>
    tpu.vector_store %arg10[%c16_32, %c0_33], %99 {strides = array<i32>} : memref<64x64xbf16, #tpu.memory_space<vmem>>, vector<8x32xbf16>,
    %101 = vector.extract_strided_slice %98 {offsets = [0, 32], sizes = [8, 32], strides = [1, 1]} : vector<8x64xbf16> to vector<8x32xbf16>
    %c40 = arith.constant 40 : index
    %c32_34 = arith.constant 32 : index
    %102 = vector.load %arg10[%c40, %c32_34] : memref<64x64xbf16, #tpu.memory_space<vmem>>, vector<8x32xbf16>
    tpu.vector_store %arg10[%c40, %c32_34], %101 {strides = array<i32>} : memref<64x64xbf16, #tpu.memory_space<vmem>>, vector<8x32xbf16>,
    %c24 = arith.constant 24 : index
    %c0_35 = arith.constant 0 : index
    %103 = vector.load %arg9[%c24, %c0_35] : memref<64x256xf32, #tpu.memory_space<vmem>>, vector<8x256xf32>
    %104 = arith.truncf %95 : vector<8x64xf32> to vector<8x64xbf16>
    %cst_36 = arith.constant dense<0.000000e+00> : vector<8x256xf32>
    %105 = tpu.matmul %104, %7, %cst_36 {dimension_numbers = #tpu.dot_dimension_numbers<[1], [0], [0], [1], [0, 0, 1, 1], [], []>} : vector<8x64xbf16>, vector<64x256xbf16>, vector<8x256xf32> -> vector<8x256xf32>
    %106 = arith.addf %103, %105 : vector<8x256xf32>
    %107 = vector.extract_strided_slice %106 {offsets = [0, 0], sizes = [8, 192], strides = [1, 1]} : vector<8x256xf32> to vector<8x192xf32>
    %108 = arith.negf %107 : vector<8x192xf32>
    %109 = math.exp %108 : vector<8x192xf32>
    %cst_37 = arith.constant 1.000000e+00 : f32
    %110 = vector.broadcast %cst_37 : f32 to vector<8x192xf32>
    %111 = arith.addf %110, %109 : vector<8x192xf32>
    %112 = arith.divf %110, %111 : vector<8x192xf32>
    %113 = vector.extract_strided_slice %112 {offsets = [0, 0], sizes = [8, 64], strides = [1, 1]} : vector<8x192xf32> to vector<8x64xf32>
    %114 = vector.extract_strided_slice %112 {offsets = [0, 64], sizes = [8, 64], strides = [1, 1]} : vector<8x192xf32> to vector<8x64xf32>
    %115 = vector.extract_strided_slice %112 {offsets = [0, 128], sizes = [8, 64], strides = [1, 1]} : vector<8x192xf32> to vector<8x64xf32>
    %116 = vector.extract_strided_slice %106 {offsets = [0, 192], sizes = [8, 64], strides = [1, 1]} : vector<8x256xf32> to vector<8x64xf32>
    %117 = math.tanh %116 : vector<8x64xf32>
    %118 = arith.mulf %114, %94 : vector<8x64xf32>
    %119 = arith.mulf %113, %117 : vector<8x64xf32>
    %120 = arith.addf %118, %119 : vector<8x64xf32>
    %121 = math.tanh %120 : vector<8x64xf32>
    %122 = arith.mulf %115, %121 : vector<8x64xf32>
    %123 = vector.extract_strided_slice %10 {offsets = [24, 0], sizes = [8, 64], strides = [1, 1]} : vector<64x64xi1> to vector<8x64xi1>
    %124 = arith.select %123, %120, %94 : vector<8x64xi1>, vector<8x64xf32>
    %125 = arith.select %123, %122, %95 : vector<8x64xi1>, vector<8x64xf32>
    %cst_38 = arith.constant 0.000000e+00 : f32
    %126 = vector.broadcast %cst_38 : f32 to vector<8x64xf32>
    %127 = arith.select %123, %122, %126 : vector<8x64xi1>, vector<8x64xf32>
    %128 = arith.truncf %127 : vector<8x64xf32> to vector<8x64xbf16>
    %129 = vector.extract_strided_slice %128 {offsets = [0, 0], sizes = [8, 32], strides = [1, 1]} : vector<8x64xbf16> to vector<8x32xbf16>
    %c24_39 = arith.constant 24 : index
    %c0_40 = arith.constant 0 : index
    %130 = vector.load %arg10[%c24_39, %c0_40] : memref<64x64xbf16, #tpu.memory_space<vmem>>, vector<8x32xbf16>
    tpu.vector_store %arg10[%c24_39, %c0_40], %129 {strides = array<i32>} : memref<64x64xbf16, #tpu.memory_space<vmem>>, vector<8x32xbf16>,
    %131 = vector.extract_strided_slice %128 {offsets = [0, 32], sizes = [8, 32], strides = [1, 1]} : vector<8x64xbf16> to vector<8x32xbf16>
    %c32_41 = arith.constant 32 : index
    %c32_42 = arith.constant 32 : index
    %132 = vector.load %arg10[%c32_41, %c32_42] : memref<64x64xbf16, #tpu.memory_space<vmem>>, vector<8x32xbf16>
    tpu.vector_store %arg10[%c32_41, %c32_42], %131 {strides = array<i32>} : memref<64x64xbf16, #tpu.memory_space<vmem>>, vector<8x32xbf16>,
    %c32_43 = arith.constant 32 : index
    %c0_44 = arith.constant 0 : index
    %133 = vector.load %arg9[%c32_43, %c0_44] : memref<64x256xf32, #tpu.memory_space<vmem>>, vector<8x256xf32>
    %134 = arith.truncf %125 : vector<8x64xf32> to vector<8x64xbf16>
    %cst_45 = arith.constant dense<0.000000e+00> : vector<8x256xf32>
    %135 = tpu.matmul %134, %7, %cst_45 {dimension_numbers = #tpu.dot_dimension_numbers<[1], [0], [0], [1], [0, 0, 1, 1], [], []>} : vector<8x64xbf16>, vector<64x256xbf16>, vector<8x256xf32> -> vector<8x256xf32>
    %136 = arith.addf %133, %135 : vector<8x256xf32>
    %137 = vector.extract_strided_slice %136 {offsets = [0, 0], sizes = [8, 192], strides = [1, 1]} : vector<8x256xf32> to vector<8x192xf32>
    %138 = arith.negf %137 : vector<8x192xf32>
    %139 = math.exp %138 : vector<8x192xf32>
    %cst_46 = arith.constant 1.000000e+00 : f32
    %140 = vector.broadcast %cst_46 : f32 to vector<8x192xf32>
    %141 = arith.addf %140, %139 : vector<8x192xf32>
    %142 = arith.divf %140, %141 : vector<8x192xf32>
    %143 = vector.extract_strided_slice %142 {offsets = [0, 0], sizes = [8, 64], strides = [1, 1]} : vector<8x192xf32> to vector<8x64xf32>
    %144 = vector.extract_strided_slice %142 {offsets = [0, 64], sizes = [8, 64], strides = [1, 1]} : vector<8x192xf32> to vector<8x64xf32>
    %145 = vector.extract_strided_slice %142 {offsets = [0, 128], sizes = [8, 64], strides = [1, 1]} : vector<8x192xf32> to vector<8x64xf32>
    %146 = vector.extract_strided_slice %136 {offsets = [0, 192], sizes = [8, 64], strides = [1, 1]} : vector<8x256xf32> to vector<8x64xf32>
    %147 = math.tanh %146 : vector<8x64xf32>
    %148 = arith.mulf %144, %124 : vector<8x64xf32>
    %149 = arith.mulf %143, %147 : vector<8x64xf32>
    %150 = arith.addf %148, %149 : vector<8x64xf32>
    %151 = math.tanh %150 : vector<8x64xf32>
    %152 = arith.mulf %145, %151 : vector<8x64xf32>
    %153 = vector.extract_strided_slice %10 {offsets = [32, 0], sizes = [8, 64], strides = [1, 1]} : vector<64x64xi1> to vector<8x64xi1>
    %154 = arith.select %153, %150, %124 : vector<8x64xi1>, vector<8x64xf32>
    %155 = arith.select %153, %152, %125 : vector<8x64xi1>, vector<8x64xf32>
    %cst_47 = arith.constant 0.000000e+00 : f32
    %156 = vector.broadcast %cst_47 : f32 to vector<8x64xf32>
    %157 = arith.select %153, %152, %156 : vector<8x64xi1>, vector<8x64xf32>
    %158 = arith.truncf %157 : vector<8x64xf32> to vector<8x64xbf16>
    %159 = vector.extract_strided_slice %158 {offsets = [0, 0], sizes = [8, 32], strides = [1, 1]} : vector<8x64xbf16> to vector<8x32xbf16>
    %c32_48 = arith.constant 32 : index
    %c0_49 = arith.constant 0 : index
    %160 = vector.load %arg10[%c32_48, %c0_49] : memref<64x64xbf16, #tpu.memory_space<vmem>>, vector<8x32xbf16>
    tpu.vector_store %arg10[%c32_48, %c0_49], %159 {strides = array<i32>} : memref<64x64xbf16, #tpu.memory_space<vmem>>, vector<8x32xbf16>,
    %161 = vector.extract_strided_slice %158 {offsets = [0, 32], sizes = [8, 32], strides = [1, 1]} : vector<8x64xbf16> to vector<8x32xbf16>
    %c24_50 = arith.constant 24 : index
    %c32_51 = arith.constant 32 : index
    %162 = vector.load %arg10[%c24_50, %c32_51] : memref<64x64xbf16, #tpu.memory_space<vmem>>, vector<8x32xbf16>
    tpu.vector_store %arg10[%c24_50, %c32_51], %161 {strides = array<i32>} : memref<64x64xbf16, #tpu.memory_space<vmem>>, vector<8x32xbf16>,
    %c40_52 = arith.constant 40 : index
    %c0_53 = arith.constant 0 : index
    %163 = vector.load %arg9[%c40_52, %c0_53] : memref<64x256xf32, #tpu.memory_space<vmem>>, vector<8x256xf32>
    %164 = arith.truncf %155 : vector<8x64xf32> to vector<8x64xbf16>
    %cst_54 = arith.constant dense<0.000000e+00> : vector<8x256xf32>
    %165 = tpu.matmul %164, %7, %cst_54 {dimension_numbers = #tpu.dot_dimension_numbers<[1], [0], [0], [1], [0, 0, 1, 1], [], []>} : vector<8x64xbf16>, vector<64x256xbf16>, vector<8x256xf32> -> vector<8x256xf32>
    %166 = arith.addf %163, %165 : vector<8x256xf32>
    %167 = vector.extract_strided_slice %166 {offsets = [0, 0], sizes = [8, 192], strides = [1, 1]} : vector<8x256xf32> to vector<8x192xf32>
    %168 = arith.negf %167 : vector<8x192xf32>
    %169 = math.exp %168 : vector<8x192xf32>
    %cst_55 = arith.constant 1.000000e+00 : f32
    %170 = vector.broadcast %cst_55 : f32 to vector<8x192xf32>
    %171 = arith.addf %170, %169 : vector<8x192xf32>
    %172 = arith.divf %170, %171 : vector<8x192xf32>
    %173 = vector.extract_strided_slice %172 {offsets = [0, 0], sizes = [8, 64], strides = [1, 1]} : vector<8x192xf32> to vector<8x64xf32>
    %174 = vector.extract_strided_slice %172 {offsets = [0, 64], sizes = [8, 64], strides = [1, 1]} : vector<8x192xf32> to vector<8x64xf32>
    %175 = vector.extract_strided_slice %172 {offsets = [0, 128], sizes = [8, 64], strides = [1, 1]} : vector<8x192xf32> to vector<8x64xf32>
    %176 = vector.extract_strided_slice %166 {offsets = [0, 192], sizes = [8, 64], strides = [1, 1]} : vector<8x256xf32> to vector<8x64xf32>
    %177 = math.tanh %176 : vector<8x64xf32>
    %178 = arith.mulf %174, %154 : vector<8x64xf32>
    %179 = arith.mulf %173, %177 : vector<8x64xf32>
    %180 = arith.addf %178, %179 : vector<8x64xf32>
    %181 = math.tanh %180 : vector<8x64xf32>
    %182 = arith.mulf %175, %181 : vector<8x64xf32>
    %183 = vector.extract_strided_slice %10 {offsets = [40, 0], sizes = [8, 64], strides = [1, 1]} : vector<64x64xi1> to vector<8x64xi1>
    %184 = arith.select %183, %180, %154 : vector<8x64xi1>, vector<8x64xf32>
    %185 = arith.select %183, %182, %155 : vector<8x64xi1>, vector<8x64xf32>
    %cst_56 = arith.constant 0.000000e+00 : f32
    %186 = vector.broadcast %cst_56 : f32 to vector<8x64xf32>
    %187 = arith.select %183, %182, %186 : vector<8x64xi1>, vector<8x64xf32>
    %188 = arith.truncf %187 : vector<8x64xf32> to vector<8x64xbf16>
    %189 = vector.extract_strided_slice %188 {offsets = [0, 0], sizes = [8, 32], strides = [1, 1]} : vector<8x64xbf16> to vector<8x32xbf16>
    %c40_57 = arith.constant 40 : index
    %c0_58 = arith.constant 0 : index
    %190 = vector.load %arg10[%c40_57, %c0_58] : memref<64x64xbf16, #tpu.memory_space<vmem>>, vector<8x32xbf16>
    tpu.vector_store %arg10[%c40_57, %c0_58], %189 {strides = array<i32>} : memref<64x64xbf16, #tpu.memory_space<vmem>>, vector<8x32xbf16>,
    %191 = vector.extract_strided_slice %188 {offsets = [0, 32], sizes = [8, 32], strides = [1, 1]} : vector<8x64xbf16> to vector<8x32xbf16>
    %c16_59 = arith.constant 16 : index
    %c32_60 = arith.constant 32 : index
    %192 = vector.load %arg10[%c16_59, %c32_60] : memref<64x64xbf16, #tpu.memory_space<vmem>>, vector<8x32xbf16>
    tpu.vector_store %arg10[%c16_59, %c32_60], %191 {strides = array<i32>} : memref<64x64xbf16, #tpu.memory_space<vmem>>, vector<8x32xbf16>,
    %c48_61 = arith.constant 48 : index
    %c0_62 = arith.constant 0 : index
    %193 = vector.load %arg9[%c48_61, %c0_62] : memref<64x256xf32, #tpu.memory_space<vmem>>, vector<8x256xf32>
    %194 = arith.truncf %185 : vector<8x64xf32> to vector<8x64xbf16>
    %cst_63 = arith.constant dense<0.000000e+00> : vector<8x256xf32>
    %195 = tpu.matmul %194, %7, %cst_63 {dimension_numbers = #tpu.dot_dimension_numbers<[1], [0], [0], [1], [0, 0, 1, 1], [], []>} : vector<8x64xbf16>, vector<64x256xbf16>, vector<8x256xf32> -> vector<8x256xf32>
    %196 = arith.addf %193, %195 : vector<8x256xf32>
    %197 = vector.extract_strided_slice %196 {offsets = [0, 0], sizes = [8, 192], strides = [1, 1]} : vector<8x256xf32> to vector<8x192xf32>
    %198 = arith.negf %197 : vector<8x192xf32>
    %199 = math.exp %198 : vector<8x192xf32>
    %cst_64 = arith.constant 1.000000e+00 : f32
    %200 = vector.broadcast %cst_64 : f32 to vector<8x192xf32>
    %201 = arith.addf %200, %199 : vector<8x192xf32>
    %202 = arith.divf %200, %201 : vector<8x192xf32>
    %203 = vector.extract_strided_slice %202 {offsets = [0, 0], sizes = [8, 64], strides = [1, 1]} : vector<8x192xf32> to vector<8x64xf32>
    %204 = vector.extract_strided_slice %202 {offsets = [0, 64], sizes = [8, 64], strides = [1, 1]} : vector<8x192xf32> to vector<8x64xf32>
    %205 = vector.extract_strided_slice %202 {offsets = [0, 128], sizes = [8, 64], strides = [1, 1]} : vector<8x192xf32> to vector<8x64xf32>
    %206 = vector.extract_strided_slice %196 {offsets = [0, 192], sizes = [8, 64], strides = [1, 1]} : vector<8x256xf32> to vector<8x64xf32>
    %207 = math.tanh %206 : vector<8x64xf32>
    %208 = arith.mulf %204, %184 : vector<8x64xf32>
    %209 = arith.mulf %203, %207 : vector<8x64xf32>
    %210 = arith.addf %208, %209 : vector<8x64xf32>
    %211 = math.tanh %210 : vector<8x64xf32>
    %212 = arith.mulf %205, %211 : vector<8x64xf32>
    %213 = vector.extract_strided_slice %10 {offsets = [48, 0], sizes = [8, 64], strides = [1, 1]} : vector<64x64xi1> to vector<8x64xi1>
    %214 = arith.select %213, %210, %184 : vector<8x64xi1>, vector<8x64xf32>
    %215 = arith.select %213, %212, %185 : vector<8x64xi1>, vector<8x64xf32>
    %cst_65 = arith.constant 0.000000e+00 : f32
    %216 = vector.broadcast %cst_65 : f32 to vector<8x64xf32>
    %217 = arith.select %213, %212, %216 : vector<8x64xi1>, vector<8x64xf32>
    %218 = arith.truncf %217 : vector<8x64xf32> to vector<8x64xbf16>
    %219 = vector.extract_strided_slice %218 {offsets = [0, 0], sizes = [8, 32], strides = [1, 1]} : vector<8x64xbf16> to vector<8x32xbf16>
    %c48_66 = arith.constant 48 : index
    %c0_67 = arith.constant 0 : index
    %220 = vector.load %arg10[%c48_66, %c0_67] : memref<64x64xbf16, #tpu.memory_space<vmem>>, vector<8x32xbf16>
    tpu.vector_store %arg10[%c48_66, %c0_67], %219 {strides = array<i32>} : memref<64x64xbf16, #tpu.memory_space<vmem>>, vector<8x32xbf16>,
    %221 = vector.extract_strided_slice %218 {offsets = [0, 32], sizes = [8, 32], strides = [1, 1]} : vector<8x64xbf16> to vector<8x32xbf16>
    %c8_68 = arith.constant 8 : index
    %c32_69 = arith.constant 32 : index
    %222 = vector.load %arg10[%c8_68, %c32_69] : memref<64x64xbf16, #tpu.memory_space<vmem>>, vector<8x32xbf16>
    tpu.vector_store %arg10[%c8_68, %c32_69], %221 {strides = array<i32>} : memref<64x64xbf16, #tpu.memory_space<vmem>>, vector<8x32xbf16>,
    %c56_70 = arith.constant 56 : index
    %c0_71 = arith.constant 0 : index
    %223 = vector.load %arg9[%c56_70, %c0_71] : memref<64x256xf32, #tpu.memory_space<vmem>>, vector<8x256xf32>
    %224 = arith.truncf %215 : vector<8x64xf32> to vector<8x64xbf16>
    %cst_72 = arith.constant dense<0.000000e+00> : vector<8x256xf32>
    %225 = tpu.matmul %224, %7, %cst_72 {dimension_numbers = #tpu.dot_dimension_numbers<[1], [0], [0], [1], [0, 0, 1, 1], [], []>} : vector<8x64xbf16>, vector<64x256xbf16>, vector<8x256xf32> -> vector<8x256xf32>
    %226 = arith.addf %223, %225 : vector<8x256xf32>
    %227 = vector.extract_strided_slice %226 {offsets = [0, 0], sizes = [8, 192], strides = [1, 1]} : vector<8x256xf32> to vector<8x192xf32>
    %228 = arith.negf %227 : vector<8x192xf32>
    %229 = math.exp %228 : vector<8x192xf32>
    %cst_73 = arith.constant 1.000000e+00 : f32
    %230 = vector.broadcast %cst_73 : f32 to vector<8x192xf32>
    %231 = arith.addf %230, %229 : vector<8x192xf32>
    %232 = arith.divf %230, %231 : vector<8x192xf32>
    %233 = vector.extract_strided_slice %232 {offsets = [0, 0], sizes = [8, 64], strides = [1, 1]} : vector<8x192xf32> to vector<8x64xf32>
    %234 = vector.extract_strided_slice %232 {offsets = [0, 64], sizes = [8, 64], strides = [1, 1]} : vector<8x192xf32> to vector<8x64xf32>
    %235 = vector.extract_strided_slice %232 {offsets = [0, 128], sizes = [8, 64], strides = [1, 1]} : vector<8x192xf32> to vector<8x64xf32>
    %236 = vector.extract_strided_slice %226 {offsets = [0, 192], sizes = [8, 64], strides = [1, 1]} : vector<8x256xf32> to vector<8x64xf32>
    %237 = math.tanh %236 : vector<8x64xf32>
    %238 = arith.mulf %234, %214 : vector<8x64xf32>
    %239 = arith.mulf %233, %237 : vector<8x64xf32>
    %240 = arith.addf %238, %239 : vector<8x64xf32>
    %241 = math.tanh %240 : vector<8x64xf32>
    %242 = arith.mulf %235, %241 : vector<8x64xf32>
    %243 = vector.extract_strided_slice %10 {offsets = [56, 0], sizes = [8, 64], strides = [1, 1]} : vector<64x64xi1> to vector<8x64xi1>
    %cst_74 = arith.constant 0.000000e+00 : f32
    %244 = vector.broadcast %cst_74 : f32 to vector<8x64xf32>
    %245 = arith.select %243, %242, %244 : vector<8x64xi1>, vector<8x64xf32>
    %246 = arith.truncf %245 : vector<8x64xf32> to vector<8x64xbf16>
    %247 = vector.extract_strided_slice %246 {offsets = [0, 0], sizes = [8, 32], strides = [1, 1]} : vector<8x64xbf16> to vector<8x32xbf16>
    %c56_75 = arith.constant 56 : index
    %c0_76 = arith.constant 0 : index
    %248 = vector.load %arg10[%c56_75, %c0_76] : memref<64x64xbf16, #tpu.memory_space<vmem>>, vector<8x32xbf16>
    tpu.vector_store %arg10[%c56_75, %c0_76], %247 {strides = array<i32>} : memref<64x64xbf16, #tpu.memory_space<vmem>>, vector<8x32xbf16>,
    %249 = vector.extract_strided_slice %246 {offsets = [0, 32], sizes = [8, 32], strides = [1, 1]} : vector<8x64xbf16> to vector<8x32xbf16>
    %c0_77 = arith.constant 0 : index
    %c32_78 = arith.constant 32 : index
    %250 = vector.load %arg10[%c0_77, %c32_78] : memref<64x64xbf16, #tpu.memory_space<vmem>>, vector<8x32xbf16>
    tpu.vector_store %arg10[%c0_77, %c32_78], %249 {strides = array<i32>} : memref<64x64xbf16, #tpu.memory_space<vmem>>, vector<8x32xbf16>,
    %c0_79 = arith.constant 0 : index
    %c0_80 = arith.constant 0 : index
    %251 = vector.load %arg10[%c0_79, %c0_80] : memref<64x64xbf16, #tpu.memory_space<vmem>>, vector<64x64xbf16>
    %c0_81 = arith.constant 0 : index
    %c0_82 = arith.constant 0 : index
    %252 = vector.load %arg6[%c0_81, %c0_82] : memref<64x128xbf16, #tpu.memory_space<vmem>>, vector<64x128xbf16>
    %cst_83 = arith.constant dense<0.000000e+00> : vector<64x128xf32>
    %253 = tpu.matmul %251, %252, %cst_83 {dimension_numbers = #tpu.dot_dimension_numbers<[1], [0], [0], [1], [0, 0, 1, 1], [], []>} : vector<64x64xbf16>, vector<64x128xbf16>, vector<64x128xf32> -> vector<64x128xf32>
    %c0_84 = arith.constant 0 : index
    %c0_85 = arith.constant 0 : index
    %254 = vector.load %arg7[%c0_84, %c0_85] : memref<1x128xf32, #tpu.memory_space<vmem>>, vector<1x128xf32>
    %255 = vector.broadcast %254 : vector<1x128xf32> to vector<64x128xf32>
    %256 = arith.addf %253, %255 : vector<64x128xf32>
    %c0_86 = arith.constant 0 : index
    %c0_87 = arith.constant 0 : index
    %257 = vector.load %arg8[%c0_86, %c0_87] : memref<64x128xf32, #tpu.memory_space<vmem>>, vector<64x128xf32>
    tpu.vector_store %arg8[%c0_86, %c0_87], %256 {strides = array<i32>} : memref<64x128xf32, #tpu.memory_space<vmem>>, vector<64x128xf32>,
    return
  }
  func.func @transform_0(%arg0: i32) -> (i32, i32) {
    %c0_i32 = arith.constant 0 : i32
    %c0_i32_0 = arith.constant 0 : i32
    %c0_i32_1 = arith.constant 0 : i32
    return %c0_i32, %c0_i32_0 : i32, i32
  }
  func.func @transform_1(%arg0: i32) -> (i32, i32) {
    %c0_i32 = arith.constant 0 : i32
    %c0_i32_0 = arith.constant 0 : i32
    %c0_i32_1 = arith.constant 0 : i32
    return %c0_i32, %c0_i32_0 : i32, i32
  }
  func.func @transform_2(%arg0: i32) -> (i32, i32) {
    %c0_i32 = arith.constant 0 : i32
    %c0_i32_0 = arith.constant 0 : i32
    %c0_i32_1 = arith.constant 0 : i32
    return %c0_i32, %c0_i32_0 : i32, i32
  }
  func.func @transform_3(%arg0: i32) -> (i32, i32) {
    %c0_i32 = arith.constant 0 : i32
    %c0_i32_0 = arith.constant 0 : i32
    %c0_i32_1 = arith.constant 0 : i32
    return %c0_i32, %c0_i32_0 : i32, i32
  }
  func.func @transform_4(%arg0: i32) -> (i32, i32) {
    %c0_i32 = arith.constant 0 : i32
    %c0_i32_0 = arith.constant 0 : i32
    %c0_i32_1 = arith.constant 0 : i32
    return %c0_i32, %c0_i32_0 : i32, i32
  }
  func.func @transform_5(%arg0: i32) -> (i32, i32) {
    %c0_i32 = arith.constant 0 : i32
    %c0_i32_0 = arith.constant 0 : i32
    %c0_i32_1 = arith.constant 0 : i32
    return %c0_i32, %c0_i32_0 : i32, i32
  }
  func.func @transform_6(%arg0: i32) -> (i32, i32) {
    %c0_i32 = arith.constant 0 : i32
    %c0_i32_0 = arith.constant 0 : i32
    %c0_i32_1 = arith.constant 0 : i32
    return %c0_i32, %c0_i32_0 : i32, i32
  }
  func.func @transform_7(%arg0: i32) -> (i32, i32) {
    %c0_i32 = arith.constant 0 : i32
    %c0_i32_0 = arith.constant 0 : i32
    %c0_i32_1 = arith.constant 0 : i32
    return %c0_i32, %c0_i32_0 : i32, i32
  }
}

</mosaic_0001>

<llo_original>
// kernel: tpu_custom_call.1
$region0: #{tpu_custom_call.1}
  #allocation0 [shape = 'u32[]', space=smem, size = 0x4, offset = 0x4, fixed_abs, tag = 'smem constant byte address 0x4 - core index']
  #allocation1 [shape = 'u32[144,128]{1,0:T(1,128)}', space=vmem, size = 0x12000, scoped, tag = 'internal scratch']
  #allocation2 [shape = 'f32[64,256]{1,0:T(8,128)}', space=vmem, size = 0x10000, scoped, tag = 'scratch operand']
  #allocation3 [shape = 'bf16[64,64]{1,0:T(8,128)(2,1)}', space=vmem, size = 0x4000, scoped, tag = 'scratch operand']
  %s0 = inlined_call_operand.hbm [shape: bf16[64,120], index: 0, kind: input, shape index: {}]
  %s1 = inlined_call_operand.hbm [shape: bf16[120,256], index: 1, kind: input, shape index: {}]
  %s2 = inlined_call_operand.hbm [shape: bf16[64,256], index: 2, kind: input, shape index: {}]
  %s3 = inlined_call_operand.vmem [shape: f32[1,256], index: 3, kind: input, shape index: {}]
  %s4 = inlined_call_operand.hbm [shape: f32[64,64], index: 4, kind: input, shape index: {}]
  %s5 = inlined_call_operand.hbm [shape: bf16[64,128], index: 5, kind: input, shape index: {}]
  %s6 = inlined_call_operand.vmem [shape: f32[1,128], index: 6, kind: input, shape index: {}]
  %s7 = inlined_call_operand.hbm [shape: f32[64,128], index: 7, kind: output, shape index: {}]
  %s8 = sld [smem:[#allocation0]]
  $region58: #{tpu_custom_call.1} parent=0
    _
  %s10 = ssub.s32 1, %s8
  %s11 = scalar_select 0, %s10, %s8
  $region1: #{tpu_custom_call.1} parent=0
    #allocation4 [shape = 'u8[16384]{0}', space=vmem, size = 0x4000, scoped, tag = 'input window, operand 0, single buffered']
    #allocation5 [shape = 's32[1]{0}', space=sflag, size = 0x4, scoped, tag = 'scoped memory for tpu_custom_call.1']
    #allocation6 [shape = 's32[1]{0}', space=sflag, size = 0x4, scoped, tag = 'scoped memory for tpu_custom_call.1']
    #allocation7 [shape = 'u8[61440]{0}', space=vmem, size = 0xf000, scoped, tag = 'input window, operand 1, single buffered']
    #allocation8 [shape = 's32[1]{0}', space=sflag, size = 0x4, scoped, tag = 'scoped memory for tpu_custom_call.1']
    #allocation9 [shape = 'u8[32768]{0}', space=vmem, size = 0x8000, scoped, tag = 'input window, operand 2, single buffered']
    #allocation10 [shape = 'u8[32768]{0}', space=vmem, size = 0x8000, scoped, tag = 'input window, operand 4, single buffered']
    #allocation11 [shape = 's32[1]{0}', space=sflag, size = 0x4, scoped, tag = 'scoped memory for tpu_custom_call.1']
    #allocation12 [shape = 'u8[16384]{0}', space=vmem, size = 0x4000, scoped, tag = 'input window, operand 5, single buffered']
    #allocation13 [shape = 'u8[32768]{0}', space=vmem, size = 0x8000, scoped, tag = 'output window, operand 0, single buffered']
    %12 = vsyncpa [#allocation5], 0
    %13 = vsyncpa [#allocation8], 0
    %14 = vsyncpa [#allocation11], 0
    %15 = vsyncpa [#allocation6], 0
    // Predicated region
    $region2: #{tpu_custom_call.1} parent=1 // pred_check
      _
    $region3: #{tpu_custom_call.1} parent=1 // pred_check_branch
      %17 = sbr.rel (0) target = $region5
    $region4: #{tpu_custom_call.1} parent=1 // pred_region
      %s19 = ssub.s32 512, 512
      %20 = vsyncadd [#allocation5], %s19
      %s21 = sshll.u32 [#allocation4], 4
      %s22 = int_to_ptr.vmem [resolvable:$true] %s21
      %27 = dma.hbm_to_vmem [thread:$0]  %s0, 512, %s22, [#allocation5], 64, 64, 4
    $region5: #{tpu_custom_call.1} parent=1 // pred_fallthru
      _
    // Predicated region
    $region6: #{tpu_custom_call.1} parent=1 // pred_check
      _
    $region7: #{tpu_custom_call.1} parent=1 // pred_check_branch
      %29 = sbr.rel (0) target = $region9
    $region8: #{tpu_custom_call.1} parent=1 // pred_region
      %s31 = ssub.s32 1920, 1920
      %32 = vsyncadd [#allocation8], %s31
      %s33 = sshll.u32 [#allocation7], 4
      %s34 = int_to_ptr.vmem [resolvable:$true] %s33
      %39 = dma.hbm_to_vmem [thread:$0]  %s1, 1920, %s34, [#allocation8], 128, 128, 8
    $region9: #{tpu_custom_call.1} parent=1 // pred_fallthru
      _
    // Predicated region
    $region10: #{tpu_custom_call.1} parent=1 // pred_check
      _
    $region11: #{tpu_custom_call.1} parent=1 // pred_check_branch
      %41 = sbr.rel (0) target = $region13
    $region12: #{tpu_custom_call.1} parent=1 // pred_region
      %s43 = ssub.s32 1024, 1024
      %44 = vsyncadd [#allocation8], %s43
      %s45 = sshll.u32 [#allocation9], 4
      %s46 = int_to_ptr.vmem [resolvable:$true] %s45
      %51 = dma.hbm_to_vmem [thread:$0]  %s2, 1024, %s46, [#allocation8], 128, 128, 8
    $region13: #{tpu_custom_call.1} parent=1 // pred_fallthru
      _
    // Predicated region
    $region14: #{tpu_custom_call.1} parent=1 // pred_check
      _
    $region15: #{tpu_custom_call.1} parent=1 // pred_check_branch
      %53 = sbr.rel (0) target = $region17
    $region16: #{tpu_custom_call.1} parent=1 // pred_region
      _
    $region17: #{tpu_custom_call.1} parent=1 // pred_fallthru
      _
    // Predicated region
    $region18: #{tpu_custom_call.1} parent=1 // pred_check
      _
    $region19: #{tpu_custom_call.1} parent=1 // pred_check_branch
      %55 = sbr.rel (0) target = $region21
    $region20: #{tpu_custom_call.1} parent=1 // pred_region
      %s57 = ssub.s32 1024, 1024
      %58 = vsyncadd [#allocation11], %s57
      %s59 = sshll.u32 [#allocation10], 4
      %s60 = int_to_ptr.vmem [resolvable:$true] %s59
      %65 = dma.hbm_to_vmem [thread:$0]  %s4, 1024, %s60, [#allocation11], 128, 128, 8
    $region21: #{tpu_custom_call.1} parent=1 // pred_fallthru
      _
    // Predicated region
    $region22: #{tpu_custom_call.1} parent=1 // pred_check
      _
    $region23: #{tpu_custom_call.1} parent=1 // pred_check_branch
      %67 = sbr.rel (0) target = $region25
    $region24: #{tpu_custom_call.1} parent=1 // pred_region
      %s69 = ssub.s32 512, 512
      %70 = vsyncadd [#allocation11], %s69
      %s71 = sshll.u32 [#allocation12], 4
      %s72 = int_to_ptr.vmem [resolvable:$true] %s71
      %77 = dma.hbm_to_vmem [thread:$0]  %s5, 512, %s72, [#allocation11], 64, 64, 4
    $region25: #{tpu_custom_call.1} parent=1 // pred_fallthru
      _
    // Predicated region
    $region26: #{tpu_custom_call.1} parent=1 // pred_check
      _
    $region27: #{tpu_custom_call.1} parent=1 // pred_check_branch
      %79 = sbr.rel (0) target = $region29
    $region28: #{tpu_custom_call.1} parent=1 // pred_region
      _
    $region29: #{tpu_custom_call.1} parent=1 // pred_fallthru
      _
    // Predicated region
    $region30: #{tpu_custom_call.1} parent=1 // pred_check
      _
    $region31: #{tpu_custom_call.1} parent=1 // pred_check_branch
      %81 = sbr.rel (0) target = $region33
    $region32: #{tpu_custom_call.1} parent=1 // pred_region
      %82 = dma.done [#allocation5], 512
    $region33: #{tpu_custom_call.1} parent=1 // pred_fallthru
      _
    // Predicated region
    $region34: #{tpu_custom_call.1} parent=1 // pred_check
      _
    $region35: #{tpu_custom_call.1} parent=1 // pred_check_branch
      %84 = sbr.rel (0) target = $region37
    $region36: #{tpu_custom_call.1} parent=1 // pred_region
      %85 = dma.done [#allocation8], 1920
    $region37: #{tpu_custom_call.1} parent=1 // pred_fallthru
      _
    // Predicated region
    $region38: #{tpu_custom_call.1} parent=1 // pred_check
      _
    $region39: #{tpu_custom_call.1} parent=1 // pred_check_branch
      %87 = sbr.rel (0) target = $region41
    $region40: #{tpu_custom_call.1} parent=1 // pred_region
      %88 = dma.done [#allocation8], 1024
    $region41: #{tpu_custom_call.1} parent=1 // pred_fallthru
      _
    // Predicated region
    $region42: #{tpu_custom_call.1} parent=1 // pred_check
      _
    $region43: #{tpu_custom_call.1} parent=1 // pred_check_branch
      %90 = sbr.rel (0) target = $region45
    $region44: #{tpu_custom_call.1} parent=1 // pred_region
      %91 = dma.done [#allocation11], 1024
    $region45: #{tpu_custom_call.1} parent=1 // pred_fallthru
      _
    // Predicated region
    $region46: #{tpu_custom_call.1} parent=1 // pred_check
      _
    $region47: #{tpu_custom_call.1} parent=1 // pred_check_branch
      %93 = sbr.rel (0) target = $region49
    $region48: #{tpu_custom_call.1} parent=1 // pred_region
      %94 = dma.done [#allocation11], 512
    $region49: #{tpu_custom_call.1} parent=1 // pred_fallthru
      _
    %v96 = vld [vmem:[#allocation4] sm:$0xf]
    %v97 = vld [vmem:[#allocation4 + $0x4] sm:$0xf]
    %v98 = vld [vmem:[#allocation4 + $0x8] sm:$0xf]
    %v99 = vld [vmem:[#allocation4 + $0xc] sm:$0xf]
    %v100 = vld [vmem:[#allocation4 + $0x10] sm:$0xf]
    %v101 = vld [vmem:[#allocation4 + $0x14] sm:$0xf]
    %v102 = vld [vmem:[#allocation4 + $0x18] sm:$0xf]
    %v103 = vld [vmem:[#allocation4 + $0x1c] sm:$0xf]
    %v104 = vld [vmem:[#allocation7] sm:$0xff]
    %v105 = vld [vmem:[#allocation7 + $0x8] sm:$0xff]
    %v106 = vld [vmem:[#allocation7 + $0x10] sm:$0xff]
    %v107 = vld [vmem:[#allocation7 + $0x18] sm:$0xff]
    %v108 = vld [vmem:[#allocation7 + $0x20] sm:$0xff]
    %v109 = vld [vmem:[#allocation7 + $0x28] sm:$0xff]
    %v110 = vld [vmem:[#allocation7 + $0x30] sm:$0xff]
    %v111 = vld [vmem:[#allocation7 + $0x38] sm:$0xff]
    %v112 = vld [vmem:[#allocation7 + $0x40] sm:$0xff]
    %v113 = vld [vmem:[#allocation7 + $0x48] sm:$0xff]
    %v114 = vld [vmem:[#allocation7 + $0x50] sm:$0xff]
    %v115 = vld [vmem:[#allocation7 + $0x58] sm:$0xff]
    %v116 = vld [vmem:[#allocation7 + $0x60] sm:$0xff]
    %v117 = vld [vmem:[#allocation7 + $0x68] sm:$0xff]
    %v118 = vld [vmem:[#allocation7 + $0x70] sm:$0xff]
    %v119 = vld [vmem:[%s3] sm:$0x3]
    %v121 = vlaneseq
    %v122 = vshrl.u32 %v121, 7
    %v123 = vsub.s32 0, %v122
    %v124 = vrot.slane %v119, %v123
    %v125 = vlaneseq
    %v126 = vshrl.u32 %v125, 7
    %v127 = vsub.s32 1, %v126
    %v128 = vrot.slane %v119, %v127
    %v139 = vunpack.c.l.b16 %v96
    %v140 = vunpack.c.l.b16 %v97
    %v141 = vunpack.c.l.b16 %v98
    %v142 = vunpack.c.l.b16 %v99
    %v143 = vunpack.c.l.b16 %v100
    %v144 = vunpack.c.l.b16 %v101
    %v145 = vunpack.c.l.b16 %v102
    %v146 = vunpack.c.l.b16 %v103
    %v147 = vpack.c.b16 %v140, %v139
    %v148 = vpack.c.b16 %v142, %v141
    %v149 = vpack.c.b16 %v144, %v143
    %v150 = vpack.c.b16 %v146, %v145
    %v166 = vunpack.c.l.b16 %v104
    %v167 = vunpack.c.h.b16 %v104
    %v168 = vunpack.c.l.b16 %v105
    %v169 = vunpack.c.h.b16 %v105
    %v170 = vunpack.c.l.b16 %v106
    %v171 = vunpack.c.h.b16 %v106
    %v172 = vunpack.c.l.b16 %v107
    %v173 = vunpack.c.h.b16 %v107
    %v174 = vunpack.c.l.b16 %v108
    %v175 = vunpack.c.h.b16 %v108
    %v176 = vunpack.c.l.b16 %v109
    %v177 = vunpack.c.h.b16 %v109
    %v178 = vunpack.c.l.b16 %v110
    %v179 = vunpack.c.h.b16 %v110
    %v180 = vunpack.c.l.b16 %v111
    %v181 = vunpack.c.h.b16 %v111
    %v182 = vunpack.c.l.b16 %v112
    %v183 = vunpack.c.h.b16 %v112
    %v184 = vunpack.c.l.b16 %v113
    %v185 = vunpack.c.h.b16 %v113
    %v186 = vunpack.c.l.b16 %v114
    %v187 = vunpack.c.h.b16 %v114
    %v188 = vunpack.c.l.b16 %v115
    %v189 = vunpack.c.h.b16 %v115
    %v190 = vunpack.c.l.b16 %v116
    %v191 = vunpack.c.h.b16 %v116
    %v192 = vunpack.c.l.b16 %v117
    %v193 = vunpack.c.h.b16 %v117
    %v194 = vunpack.c.l.b16 %v118
    %v195 = vunpack.c.h.b16 %v118
    %v196 = vpack.c.b16 %v168, %v166
    %v197 = vpack.c.b16 %v169, %v167
    %v198 = vpack.c.b16 %v172, %v170
    %v199 = vpack.c.b16 %v173, %v171
    %v200 = vpack.c.b16 %v176, %v174
    %v201 = vpack.c.b16 %v177, %v175
    %v202 = vpack.c.b16 %v180, %v178
    %v203 = vpack.c.b16 %v181, %v179
    %v204 = vpack.c.b16 %v184, %v182
    %v205 = vpack.c.b16 %v185, %v183
    %v206 = vpack.c.b16 %v188, %v186
    %v207 = vpack.c.b16 %v189, %v187
    %v208 = vpack.c.b16 %v192, %v190
    %v209 = vpack.c.b16 %v193, %v191
    %v210 = vpack.c.b16 %v194, %v194
    %v211 = vpack.c.b16 %v195, %v195
    %vm226 = vcmask 982016
    %v228 = vsel %vm226, %v147, 0
    %v231 = vsel %vm226, %v148, 0
    %v234 = vsel %vm226, %v149, 0
    %v237 = vsel %vm226, %v150, 0
    %vm239 = vcmask 1043456
    %v241 = vsel %vm239, %v210, 0
    %v244 = vsel %vm239, %v211, 0
    %246 = vmatprep.subr.bf16.mxu0 %v244
    %247 = vmatpush1.bf16.msra.mxu0 %v241
    %248 = vmatprep.subr.bf16.mxu0 %v209
    %249 = vmatpush1.bf16.msra.mxu0 %v208
    %250 = vmatprep.subr.bf16.mxu0 %v207
    %251 = vmatpush1.bf16.msra.mxu0 %v206
    %252 = vmatprep.subr.bf16.mxu0 %v205
    %253 = vmatpush1.bf16.msra.mxu0 %v204
    %254 = vmatprep.subr.bf16.mxu0 %v203
    %255 = vmatpush1.bf16.msra.mxu0 %v202
    %256 = vmatprep.subr.bf16.mxu0 %v201
    %257 = vmatpush1.bf16.msra.mxu0 %v200
    %258 = vmatprep.subr.bf16.mxu0 %v199
    %259 = vmatpush1.bf16.msra.mxu0 %v198
    %260 = vmatprep.subr.bf16.mxu0 %v197
    %261 = vmatpush1.bf16.msra.mxu0 %v196
    %262 = vmatprep.subr.bf16.mxu0 0
    %263 = vmatpush2.bf16.msra.mxu0 0
    %264 = vmatprep.subr.bf16.mxu0 0
    %265 = vmatpush2.bf16.msra.mxu0 0
    %266 = vmatprep.subr.bf16.mxu0 0
    %267 = vmatpush2.bf16.msra.mxu0 0
    %268 = vmatprep.subr.bf16.mxu0 0
    %269 = vmatpush2.bf16.msra.mxu0 0
    %270 = vmatprep.subr.bf16.mxu0 0
    %271 = vmatpush2.bf16.msra.mxu0 0
    %272 = vmatprep.subr.bf16.mxu0 0
    %273 = vmatpush2.bf16.msra.mxu0 0
    %274 = vmatprep.subr.bf16.mxu0 0
    %275 = vmatpush2.bf16.msra.mxu0 0
    %276 = vmatprep.subr.bf16.mxu0 0
    %277 = vmatpush2.bf16.msra.mxu0 0
    %278 = vmatprep.mubr.bf16.mxu0 0
    %279 = vmatmul.mubr.bf16.gmra.mxu0 %v228
    %v280 = vpop.f32.mrf.mxu0
    %v281 = vadd.f32 %v124, %v280
    %v282 = vpop.f32.mrf.mxu0
    %v283 = vadd.f32 %v128, %v282
    %v284 = vpop.f32.mrf.mxu0
    %v285 = vadd.f32 %v124, %v284
    %v286 = vpop.f32.mrf.mxu0
    %v287 = vadd.f32 %v128, %v286
    %288 = vmatprep.mubr.bf16.mxu0 0
    %289 = vmatmul.mubr.bf16.gmra.mxu0 %v231
    %v290 = vpop.f32.mrf.mxu0
    %v291 = vadd.f32 %v124, %v290
    %v292 = vpop.f32.mrf.mxu0
    %v293 = vadd.f32 %v128, %v292
    %v294 = vpop.f32.mrf.mxu0
    %v295 = vadd.f32 %v124, %v294
    %v296 = vpop.f32.mrf.mxu0
    %v297 = vadd.f32 %v128, %v296
    %298 = vmatprep.mubr.bf16.mxu0 0
    %299 = vmatmul.mubr.bf16.gmra.mxu0 %v234
    %v300 = vpop.f32.mrf.mxu0
    %v301 = vadd.f32 %v124, %v300
    %v302 = vpop.f32.mrf.mxu0
    %v303 = vadd.f32 %v128, %v302
    %v304 = vpop.f32.mrf.mxu0
    %v305 = vadd.f32 %v124, %v304
    %v306 = vpop.f32.mrf.mxu0
    %v307 = vadd.f32 %v128, %v306
    %308 = vmatprep.mubr.bf16.mxu0 0
    %309 = vmatmul.mubr.bf16.gmra.mxu0 %v237
    %v310 = vpop.f32.mrf.mxu0
    %v311 = vadd.f32 %v124, %v310
    %v312 = vpop.f32.mrf.mxu0
    %v313 = vadd.f32 %v128, %v312
    %v314 = vpop.f32.mrf.mxu0
    %v315 = vadd.f32 %v124, %v314
    %v316 = vpop.f32.mrf.mxu0
    %v317 = vadd.f32 %v128, %v316
    %318 = vdwg.mxu0
    %319 = vst [vmem:[#allocation2] sm:$0xff] %v281
    %320 = vst [vmem:[#allocation2 + $0x8] sm:$0xff] %v283
    %321 = vst [vmem:[#allocation2 + $0x10] sm:$0xff] %v285
    %322 = vst [vmem:[#allocation2 + $0x18] sm:$0xff] %v287
    %323 = vst [vmem:[#allocation2 + $0x20] sm:$0xff] %v291
    %324 = vst [vmem:[#allocation2 + $0x28] sm:$0xff] %v293
    %325 = vst [vmem:[#allocation2 + $0x30] sm:$0xff] %v295
    %326 = vst [vmem:[#allocation2 + $0x38] sm:$0xff] %v297
    %327 = vst [vmem:[#allocation2 + $0x40] sm:$0xff] %v301
    %328 = vst [vmem:[#allocation2 + $0x48] sm:$0xff] %v303
    %329 = vst [vmem:[#allocation2 + $0x50] sm:$0xff] %v305
    %330 = vst [vmem:[#allocation2 + $0x58] sm:$0xff] %v307
    %331 = vst [vmem:[#allocation2 + $0x60] sm:$0xff] %v311
    %332 = vst [vmem:[#allocation2 + $0x68] sm:$0xff] %v313
    %333 = vst [vmem:[#allocation2 + $0x70] sm:$0xff] %v315
    %334 = vst [vmem:[#allocation2 + $0x78] sm:$0xff] %v317
    %v335 = vld [vmem:[#allocation9] sm:$0xff]
    %v336 = vld [vmem:[#allocation9 + $0x8] sm:$0xff]
    %v337 = vld [vmem:[#allocation9 + $0x10] sm:$0xff]
    %v338 = vld [vmem:[#allocation9 + $0x18] sm:$0xff]
    %v339 = vld [vmem:[#allocation9 + $0x20] sm:$0xff]
    %v340 = vld [vmem:[#allocation9 + $0x28] sm:$0xff]
    %v341 = vld [vmem:[#allocation9 + $0x30] sm:$0xff]
    %v342 = vld [vmem:[#allocation9 + $0x38] sm:$0xff]
    %v343 = vld [vmem:[#allocation10] sm:$0xff]
    %v344 = vld [vmem:[#allocation10 + $0x8] sm:$0xff]
    %v345 = vld [vmem:[#allocation10 + $0x10] sm:$0xff]
    %v346 = vld [vmem:[#allocation10 + $0x18] sm:$0xff]
    %v347 = vld [vmem:[#allocation10 + $0x20] sm:$0xff]
    %v348 = vld [vmem:[#allocation10 + $0x28] sm:$0xff]
    %v349 = vld [vmem:[#allocation10 + $0x30] sm:$0xff]
    %v350 = vld [vmem:[#allocation10 + $0x38] sm:$0xff]
    %vm351 = vcmp.gt.f32.partialorder %v343, 0.5
    %vm352 = vcmp.gt.f32.partialorder %v344, 0.5
    %vm353 = vcmp.gt.f32.partialorder %v345, 0.5
    %vm354 = vcmp.gt.f32.partialorder %v346, 0.5
    %vm355 = vcmp.gt.f32.partialorder %v347, 0.5
    %vm356 = vcmp.gt.f32.partialorder %v348, 0.5
    %vm357 = vcmp.gt.f32.partialorder %v349, 0.5
    %vm358 = vcmp.gt.f32.partialorder %v350, 0.5
    %v359 = vld [vmem:[#allocation2] sm:$0xff]
    %v360 = vld [vmem:[#allocation2 + $0x8] sm:$0xff]
    %v369 = vunpack.c.l.b16 %v335
    %v370 = vunpack.c.h.b16 %v335
    %v371 = vunpack.c.l.b16 %v336
    %v372 = vunpack.c.h.b16 %v336
    %v373 = vunpack.c.l.b16 %v337
    %v374 = vunpack.c.h.b16 %v337
    %v375 = vunpack.c.l.b16 %v338
    %v376 = vunpack.c.h.b16 %v338
    %v377 = vunpack.c.l.b16 %v339
    %v378 = vunpack.c.h.b16 %v339
    %v379 = vunpack.c.l.b16 %v340
    %v380 = vunpack.c.h.b16 %v340
    %v381 = vunpack.c.l.b16 %v341
    %v382 = vunpack.c.h.b16 %v341
    %v383 = vunpack.c.l.b16 %v342
    %v384 = vunpack.c.h.b16 %v342
    %v385 = vpack.c.b16 %v371, %v369
    %v386 = vpack.c.b16 %v372, %v370
    %v387 = vpack.c.b16 %v375, %v373
    %v388 = vpack.c.b16 %v376, %v374
    %v389 = vpack.c.b16 %v379, %v377
    %v390 = vpack.c.b16 %v380, %v378
    %v391 = vpack.c.b16 %v383, %v381
    %v392 = vpack.c.b16 %v384, %v382
    %vm401 = vcmask 523264
    %v403 = vsel %vm401, 0, 0
    %405 = vmatprep.subr.bf16.mxu0 0
    %406 = vmatpush1.bf16.msra.mxu0 0
    %407 = vmatprep.subr.bf16.mxu0 0
    %408 = vmatpush1.bf16.msra.mxu0 0
    %409 = vmatprep.subr.bf16.mxu0 0
    %410 = vmatpush1.bf16.msra.mxu0 0
    %411 = vmatprep.subr.bf16.mxu0 0
    %412 = vmatpush1.bf16.msra.mxu0 0
    %413 = vmatprep.subr.bf16.mxu0 %v392
    %414 = vmatpush1.bf16.msra.mxu0 %v391
    %415 = vmatprep.subr.bf16.mxu0 %v390
    %416 = vmatpush1.bf16.msra.mxu0 %v389
    %417 = vmatprep.subr.bf16.mxu0 %v388
    %418 = vmatpush1.bf16.msra.mxu0 %v387
    %419 = vmatprep.subr.bf16.mxu0 %v386
    %420 = vmatpush1.bf16.msra.mxu0 %v385
    %421 = vmatprep.subr.bf16.mxu0 0
    %422 = vmatpush2.bf16.msra.mxu0 0
    %423 = vmatprep.subr.bf16.mxu0 0
    %424 = vmatpush2.bf16.msra.mxu0 0
    %425 = vmatprep.subr.bf16.mxu0 0
    %426 = vmatpush2.bf16.msra.mxu0 0
    %427 = vmatprep.subr.bf16.mxu0 0
    %428 = vmatpush2.bf16.msra.mxu0 0
    %429 = vmatprep.subr.bf16.mxu0 0
    %430 = vmatpush2.bf16.msra.mxu0 0
    %431 = vmatprep.subr.bf16.mxu0 0
    %432 = vmatpush2.bf16.msra.mxu0 0
    %433 = vmatprep.subr.bf16.mxu0 0
    %434 = vmatpush2.bf16.msra.mxu0 0
    %435 = vmatprep.subr.bf16.mxu0 0
    %436 = vmatpush2.bf16.msra.mxu0 0
    %437 = vmatprep.mubr.bf16.mxu0 0
    %438 = vmatmul.mubr.bf16.gmra.mxu0 %v403
    %v439 = vpop.f32.mrf.mxu0
    %v440 = vadd.f32 0.0, %v439
    %v441 = vpop.f32.mrf.mxu0
    %v442 = vadd.f32 0.0, %v441
    %v443 = vpop.f32.mrf.mxu0
    %v444 = vpop.f32.mrf.mxu0
    %445 = vdwg.mxu0
    %v446 = vadd.f32 %v359, %v440
    %v447 = vadd.f32 %v360, %v442
    %v448 = vxor.u32 %v446, 2147483648
    %v449 = vxor.u32 %v447, 2147483648
    %v450 = vmul.f32 %v448, 1.442695
    %v451 = vpow.pop %v450
    %v452 = vmul.f32 %v449, 1.442695
    %v453 = vpow.pop %v452
    %v454 = vadd.f32 %v451, 1.0
    %v455 = vadd.f32 %v453, 1.0
    %v456 = vrcp.pop %v454
    %v457 = vmul.f32 1.0, %v456
    %v458 = vrcp.pop %v455
    %v459 = vmul.f32 1.0, %v458
    %v460 = vtanh.pop %v447
    %v461 = vmul.f32 %v457, 0.0
    %463 = vrot.lane.b32.xlu0 %v460, 64
    %v464 = vpop.permute.xlu0 %463
    %v466 = vmul.f32 %v457, %v464
    %468 = vrot.lane.b32.xlu0 %v466, 64
    %v469 = vpop.permute.xlu0 %468
    %v471 = vadd.f32 %v461, %v469
    %v472 = vtanh.pop %v471
    %474 = vrot.lane.b32.xlu0 %v472, 64
    %v475 = vpop.permute.xlu0 %474
    %v477 = vmul.f32 %v459, %v475
    %479 = vrot.lane.b32.xlu0 %v471, 64
    %v480 = vpop.permute.xlu0 %479
    %v482 = vsel %vm351, %v480, 0.0
    %v483 = vsel %vm351, %v477, 0.0
    %v484 = vpack.c.bf16 %v483, %v483
    %vm485 = vcmask 257024
    %486 = vst.msk [vmem:[#allocation3] sm:$0xf] %vm485, %v484
    %vm487 = vcmask 519424
    %488 = vst.msk [vmem:[#allocation3 + $0x1c] sm:$0xf] %vm487, %v484
    %v489 = vld [vmem:[#allocation2 + $0x10] sm:$0xff]
    %v490 = vld [vmem:[#allocation2 + $0x18] sm:$0xff]
    %v492 = vsel %vm401, %v484, 0
    %494 = vmatprep.subr.bf16.mxu0 0
    %495 = vmatpush1.bf16.msra.mxu0 0
    %496 = vmatprep.subr.bf16.mxu0 0
    %497 = vmatpush1.bf16.msra.mxu0 0
    %498 = vmatprep.subr.bf16.mxu0 0
    %499 = vmatpush1.bf16.msra.mxu0 0
    %500 = vmatprep.subr.bf16.mxu0 0
    %501 = vmatpush1.bf16.msra.mxu0 0
    %502 = vmatprep.subr.bf16.mxu0 %v392
    %503 = vmatpush1.bf16.msra.mxu0 %v391
    %504 = vmatprep.subr.bf16.mxu0 %v390
    %505 = vmatpush1.bf16.msra.mxu0 %v389
    %506 = vmatprep.subr.bf16.mxu0 %v388
    %507 = vmatpush1.bf16.msra.mxu0 %v387
    %508 = vmatprep.subr.bf16.mxu0 %v386
    %509 = vmatpush1.bf16.msra.mxu0 %v385
    %510 = vmatprep.subr.bf16.mxu0 0
    %511 = vmatpush2.bf16.msra.mxu0 0
    %512 = vmatprep.subr.bf16.mxu0 0
    %513 = vmatpush2.bf16.msra.mxu0 0
    %514 = vmatprep.subr.bf16.mxu0 0
    %515 = vmatpush2.bf16.msra.mxu0 0
    %516 = vmatprep.subr.bf16.mxu0 0
    %517 = vmatpush2.bf16.msra.mxu0 0
    %518 = vmatprep.subr.bf16.mxu0 0
    %519 = vmatpush2.bf16.msra.mxu0 0
    %520 = vmatprep.subr.bf16.mxu0 0
    %521 = vmatpush2.bf16.msra.mxu0 0
    %522 = vmatprep.subr.bf16.mxu0 0
    %523 = vmatpush2.bf16.msra.mxu0 0
    %524 = vmatprep.subr.bf16.mxu0 0
    %525 = vmatpush2.bf16.msra.mxu0 0
    %526 = vmatprep.mubr.bf16.mxu0 0
    %527 = vmatmul.mubr.bf16.gmra.mxu0 %v492
    %v528 = vpop.f32.mrf.mxu0
    %v529 = vadd.f32 0.0, %v528
    %v530 = vpop.f32.mrf.mxu0
    %v531 = vadd.f32 0.0, %v530
    %v532 = vpop.f32.mrf.mxu0
    %v533 = vpop.f32.mrf.mxu0
    %534 = vdwg.mxu0
    %v535 = vadd.f32 %v489, %v529
    %v536 = vadd.f32 %v490, %v531
    %v537 = vxor.u32 %v535, 2147483648
    %v538 = vxor.u32 %v536, 2147483648
    %v539 = vmul.f32 %v537, 1.442695
    %v540 = vpow.pop %v539
    %v541 = vmul.f32 %v538, 1.442695
    %v542 = vpow.pop %v541
    %v543 = vadd.f32 %v540, 1.0
    %v544 = vadd.f32 %v542, 1.0
    %v545 = vrcp.pop %v543
    %v546 = vmul.f32 1.0, %v545
    %v547 = vrcp.pop %v544
    %v548 = vmul.f32 1.0, %v547
    %v549 = vtanh.pop %v536
    %551 = vrot.lane.b32.xlu0 %v482, 64
    %v552 = vpop.permute.xlu0 %551
    %v554 = vmul.f32 %v546, %v552
    %556 = vrot.lane.b32.xlu0 %v549, 64
    %v557 = vpop.permute.xlu0 %556
    %v559 = vmul.f32 %v546, %v557
    %561 = vrot.lane.b32.xlu0 %v559, 64
    %v562 = vpop.permute.xlu0 %561
    %v564 = vadd.f32 %v554, %v562
    %v565 = vtanh.pop %v564
    %567 = vrot.lane.b32.xlu0 %v565, 64
    %v568 = vpop.permute.xlu0 %567
    %v570 = vmul.f32 %v548, %v568
    %572 = vrot.lane.b32.xlu0 %v564, 64
    %v573 = vpop.permute.xlu0 %572
    %v575 = vsel %vm352, %v573, %v482
    %v576 = vsel %vm352, %v570, %v483
    %v577 = vsel %vm352, %v570, 0.0
    %v578 = vpack.c.bf16 %v577, %v577
    %579 = vst.msk [vmem:[#allocation3 + $0x4] sm:$0xf] %vm485, %v578
    %580 = vst.msk [vmem:[#allocation3 + $0x18] sm:$0xf] %vm487, %v578
    %v581 = vld [vmem:[#allocation2 + $0x20] sm:$0xff]
    %v582 = vld [vmem:[#allocation2 + $0x28] sm:$0xff]
    %v583 = vpack.c.bf16 %v576, %v576
    %v585 = vsel %vm401, %v583, 0
    %587 = vmatprep.subr.bf16.mxu0 0
    %588 = vmatpush1.bf16.msra.mxu0 0
    %589 = vmatprep.subr.bf16.mxu0 0
    %590 = vmatpush1.bf16.msra.mxu0 0
    %591 = vmatprep.subr.bf16.mxu0 0
    %592 = vmatpush1.bf16.msra.mxu0 0
    %593 = vmatprep.subr.bf16.mxu0 0
    %594 = vmatpush1.bf16.msra.mxu0 0
    %595 = vmatprep.subr.bf16.mxu0 %v392
    %596 = vmatpush1.bf16.msra.mxu0 %v391
    %597 = vmatprep.subr.bf16.mxu0 %v390
    %598 = vmatpush1.bf16.msra.mxu0 %v389
    %599 = vmatprep.subr.bf16.mxu0 %v388
    %600 = vmatpush1.bf16.msra.mxu0 %v387
    %601 = vmatprep.subr.bf16.mxu0 %v386
    %602 = vmatpush1.bf16.msra.mxu0 %v385
    %603 = vmatprep.subr.bf16.mxu0 0
    %604 = vmatpush2.bf16.msra.mxu0 0
    %605 = vmatprep.subr.bf16.mxu0 0
    %606 = vmatpush2.bf16.msra.mxu0 0
    %607 = vmatprep.subr.bf16.mxu0 0
    %608 = vmatpush2.bf16.msra.mxu0 0
    %609 = vmatprep.subr.bf16.mxu0 0
    %610 = vmatpush2.bf16.msra.mxu0 0
    %611 = vmatprep.subr.bf16.mxu0 0
    %612 = vmatpush2.bf16.msra.mxu0 0
    %613 = vmatprep.subr.bf16.mxu0 0
    %614 = vmatpush2.bf16.msra.mxu0 0
    %615 = vmatprep.subr.bf16.mxu0 0
    %616 = vmatpush2.bf16.msra.mxu0 0
    %617 = vmatprep.subr.bf16.mxu0 0
    %618 = vmatpush2.bf16.msra.mxu0 0
    %619 = vmatprep.mubr.bf16.mxu0 0
    %620 = vmatmul.mubr.bf16.gmra.mxu0 %v585
    %v621 = vpop.f32.mrf.mxu0
    %v622 = vadd.f32 0.0, %v621
    %v623 = vpop.f32.mrf.mxu0
    %v624 = vadd.f32 0.0, %v623
    %v625 = vpop.f32.mrf.mxu0
    %v626 = vpop.f32.mrf.mxu0
    %627 = vdwg.mxu0
    %v628 = vadd.f32 %v581, %v622
    %v629 = vadd.f32 %v582, %v624
    %v630 = vxor.u32 %v628, 2147483648
    %v631 = vxor.u32 %v629, 2147483648
    %v632 = vmul.f32 %v630, 1.442695
    %v633 = vpow.pop %v632
    %v634 = vmul.f32 %v631, 1.442695
    %v635 = vpow.pop %v634
    %v636 = vadd.f32 %v633, 1.0
    %v637 = vadd.f32 %v635, 1.0
    %v638 = vrcp.pop %v636
    %v639 = vmul.f32 1.0, %v638
    %v640 = vrcp.pop %v637
    %v641 = vmul.f32 1.0, %v640
    %v642 = vtanh.pop %v629
    %644 = vrot.lane.b32.xlu0 %v575, 64
    %v645 = vpop.permute.xlu0 %644
    %v647 = vmul.f32 %v639, %v645
    %649 = vrot.lane.b32.xlu0 %v642, 64
    %v650 = vpop.permute.xlu0 %649
    %v652 = vmul.f32 %v639, %v650
    %654 = vrot.lane.b32.xlu0 %v652, 64
    %v655 = vpop.permute.xlu0 %654
    %v657 = vadd.f32 %v647, %v655
    %v658 = vtanh.pop %v657
    %660 = vrot.lane.b32.xlu0 %v658, 64
    %v661 = vpop.permute.xlu0 %660
    %v663 = vmul.f32 %v641, %v661
    %665 = vrot.lane.b32.xlu0 %v657, 64
    %v666 = vpop.permute.xlu0 %665
    %v668 = vsel %vm353, %v666, %v575
    %v669 = vsel %vm353, %v663, %v576
    %v670 = vsel %vm353, %v663, 0.0
    %v671 = vpack.c.bf16 %v670, %v670
    %672 = vst.msk [vmem:[#allocation3 + $0x8] sm:$0xf] %vm485, %v671
    %673 = vst.msk [vmem:[#allocation3 + $0x14] sm:$0xf] %vm487, %v671
    %v674 = vld [vmem:[#allocation2 + $0x30] sm:$0xff]
    %v675 = vld [vmem:[#allocation2 + $0x38] sm:$0xff]
    %v676 = vpack.c.bf16 %v669, %v669
    %v678 = vsel %vm401, %v676, 0
    %680 = vmatprep.subr.bf16.mxu0 0
    %681 = vmatpush1.bf16.msra.mxu0 0
    %682 = vmatprep.subr.bf16.mxu0 0
    %683 = vmatpush1.bf16.msra.mxu0 0
    %684 = vmatprep.subr.bf16.mxu0 0
    %685 = vmatpush1.bf16.msra.mxu0 0
    %686 = vmatprep.subr.bf16.mxu0 0
    %687 = vmatpush1.bf16.msra.mxu0 0
    %688 = vmatprep.subr.bf16.mxu0 %v392
    %689 = vmatpush1.bf16.msra.mxu0 %v391
    %690 = vmatprep.subr.bf16.mxu0 %v390
    %691 = vmatpush1.bf16.msra.mxu0 %v389
    %692 = vmatprep.subr.bf16.mxu0 %v388
    %693 = vmatpush1.bf16.msra.mxu0 %v387
    %694 = vmatprep.subr.bf16.mxu0 %v386
    %695 = vmatpush1.bf16.msra.mxu0 %v385
    %696 = vmatprep.subr.bf16.mxu0 0
    %697 = vmatpush2.bf16.msra.mxu0 0
    %698 = vmatprep.subr.bf16.mxu0 0
    %699 = vmatpush2.bf16.msra.mxu0 0
    %700 = vmatprep.subr.bf16.mxu0 0
    %701 = vmatpush2.bf16.msra.mxu0 0
    %702 = vmatprep.subr.bf16.mxu0 0
    %703 = vmatpush2.bf16.msra.mxu0 0
    %704 = vmatprep.subr.bf16.mxu0 0
    %705 = vmatpush2.bf16.msra.mxu0 0
    %706 = vmatprep.subr.bf16.mxu0 0
    %707 = vmatpush2.bf16.msra.mxu0 0
    %708 = vmatprep.subr.bf16.mxu0 0
    %709 = vmatpush2.bf16.msra.mxu0 0
    %710 = vmatprep.subr.bf16.mxu0 0
    %711 = vmatpush2.bf16.msra.mxu0 0
    %712 = vmatprep.mubr.bf16.mxu0 0
    %713 = vmatmul.mubr.bf16.gmra.mxu0 %v678
    %v714 = vpop.f32.mrf.mxu0
    %v715 = vadd.f32 0.0, %v714
    %v716 = vpop.f32.mrf.mxu0
    %v717 = vadd.f32 0.0, %v716
    %v718 = vpop.f32.mrf.mxu0
    %v719 = vpop.f32.mrf.mxu0
    %720 = vdwg.mxu0
    %v721 = vadd.f32 %v674, %v715
    %v722 = vadd.f32 %v675, %v717
    %v723 = vxor.u32 %v721, 2147483648
    %v724 = vxor.u32 %v722, 2147483648
    %v725 = vmul.f32 %v723, 1.442695
    %v726 = vpow.pop %v725
    %v727 = vmul.f32 %v724, 1.442695
    %v728 = vpow.pop %v727
    %v729 = vadd.f32 %v726, 1.0
    %v730 = vadd.f32 %v728, 1.0
    %v731 = vrcp.pop %v729
    %v732 = vmul.f32 1.0, %v731
    %v733 = vrcp.pop %v730
    %v734 = vmul.f32 1.0, %v733
    %v735 = vtanh.pop %v722
    %737 = vrot.lane.b32.xlu0 %v668, 64
    %v738 = vpop.permute.xlu0 %737
    %v740 = vmul.f32 %v732, %v738
    %742 = vrot.lane.b32.xlu0 %v735, 64
    %v743 = vpop.permute.xlu0 %742
    %v745 = vmul.f32 %v732, %v743
    %747 = vrot.lane.b32.xlu0 %v745, 64
    %v748 = vpop.permute.xlu0 %747
    %v750 = vadd.f32 %v740, %v748
    %v751 = vtanh.pop %v750
    %753 = vrot.lane.b32.xlu0 %v751, 64
    %v754 = vpop.permute.xlu0 %753
    %v756 = vmul.f32 %v734, %v754
    %758 = vrot.lane.b32.xlu0 %v750, 64
    %v759 = vpop.permute.xlu0 %758
    %v761 = vsel %vm354, %v759, %v668
    %v762 = vsel %vm354, %v756, %v669
    %v763 = vsel %vm354, %v756, 0.0
    %v764 = vpack.c.bf16 %v763, %v763
    %765 = vst.msk [vmem:[#allocation3 + $0xc] sm:$0xf] %vm485, %v764
    %766 = vst.msk [vmem:[#allocation3 + $0x10] sm:$0xf] %vm487, %v764
    %v767 = vld [vmem:[#allocation2 + $0x40] sm:$0xff]
    %v768 = vld [vmem:[#allocation2 + $0x48] sm:$0xff]
    %v769 = vpack.c.bf16 %v762, %v762
    %v771 = vsel %vm401, %v769, 0
    %773 = vmatprep.subr.bf16.mxu0 0
    %774 = vmatpush1.bf16.msra.mxu0 0
    %775 = vmatprep.subr.bf16.mxu0 0
    %776 = vmatpush1.bf16.msra.mxu0 0
    %777 = vmatprep.subr.bf16.mxu0 0
    %778 = vmatpush1.bf16.msra.mxu0 0
    %779 = vmatprep.subr.bf16.mxu0 0
    %780 = vmatpush1.bf16.msra.mxu0 0
    %781 = vmatprep.subr.bf16.mxu0 %v392
    %782 = vmatpush1.bf16.msra.mxu0 %v391
    %783 = vmatprep.subr.bf16.mxu0 %v390
    %784 = vmatpush1.bf16.msra.mxu0 %v389
    %785 = vmatprep.subr.bf16.mxu0 %v388
    %786 = vmatpush1.bf16.msra.mxu0 %v387
    %787 = vmatprep.subr.bf16.mxu0 %v386
    %788 = vmatpush1.bf16.msra.mxu0 %v385
    %789 = vmatprep.subr.bf16.mxu0 0
    %790 = vmatpush2.bf16.msra.mxu0 0
    %791 = vmatprep.subr.bf16.mxu0 0
    %792 = vmatpush2.bf16.msra.mxu0 0
    %793 = vmatprep.subr.bf16.mxu0 0
    %794 = vmatpush2.bf16.msra.mxu0 0
    %795 = vmatprep.subr.bf16.mxu0 0
    %796 = vmatpush2.bf16.msra.mxu0 0
    %797 = vmatprep.subr.bf16.mxu0 0
    %798 = vmatpush2.bf16.msra.mxu0 0
    %799 = vmatprep.subr.bf16.mxu0 0
    %800 = vmatpush2.bf16.msra.mxu0 0
    %801 = vmatprep.subr.bf16.mxu0 0
    %802 = vmatpush2.bf16.msra.mxu0 0
    %803 = vmatprep.subr.bf16.mxu0 0
    %804 = vmatpush2.bf16.msra.mxu0 0
    %805 = vmatprep.mubr.bf16.mxu0 0
    %806 = vmatmul.mubr.bf16.gmra.mxu0 %v771
    %v807 = vpop.f32.mrf.mxu0
    %v808 = vadd.f32 0.0, %v807
    %v809 = vpop.f32.mrf.mxu0
    %v810 = vadd.f32 0.0, %v809
    %v811 = vpop.f32.mrf.mxu0
    %v812 = vpop.f32.mrf.mxu0
    %813 = vdwg.mxu0
    %v814 = vadd.f32 %v767, %v808
    %v815 = vadd.f32 %v768, %v810
    %v816 = vxor.u32 %v814, 2147483648
    %v817 = vxor.u32 %v815, 2147483648
    %v818 = vmul.f32 %v816, 1.442695
    %v819 = vpow.pop %v818
    %v820 = vmul.f32 %v817, 1.442695
    %v821 = vpow.pop %v820
    %v822 = vadd.f32 %v819, 1.0
    %v823 = vadd.f32 %v821, 1.0
    %v824 = vrcp.pop %v822
    %v825 = vmul.f32 1.0, %v824
    %v826 = vrcp.pop %v823
    %v827 = vmul.f32 1.0, %v826
    %v828 = vtanh.pop %v815
    %830 = vrot.lane.b32.xlu0 %v761, 64
    %v831 = vpop.permute.xlu0 %830
    %v833 = vmul.f32 %v825, %v831
    %835 = vrot.lane.b32.xlu0 %v828, 64
    %v836 = vpop.permute.xlu0 %835
    %v838 = vmul.f32 %v825, %v836
    %840 = vrot.lane.b32.xlu0 %v838, 64
    %v841 = vpop.permute.xlu0 %840
    %v843 = vadd.f32 %v833, %v841
    %v844 = vtanh.pop %v843
    %846 = vrot.lane.b32.xlu0 %v844, 64
    %v847 = vpop.permute.xlu0 %846
    %v849 = vmul.f32 %v827, %v847
    %851 = vrot.lane.b32.xlu0 %v843, 64
    %v852 = vpop.permute.xlu0 %851
    %v854 = vsel %vm355, %v852, %v761
    %v855 = vsel %vm355, %v849, %v762
    %v856 = vsel %vm355, %v849, 0.0
    %v857 = vpack.c.bf16 %v856, %v856
    %858 = vst.msk [vmem:[#allocation3 + $0x10] sm:$0xf] %vm485, %v857
    %859 = vst.msk [vmem:[#allocation3 + $0xc] sm:$0xf] %vm487, %v857
    %v860 = vld [vmem:[#allocation2 + $0x50] sm:$0xff]
    %v861 = vld [vmem:[#allocation2 + $0x58] sm:$0xff]
    %v862 = vpack.c.bf16 %v855, %v855
    %v864 = vsel %vm401, %v862, 0
    %866 = vmatprep.subr.bf16.mxu0 0
    %867 = vmatpush1.bf16.msra.mxu0 0
    %868 = vmatprep.subr.bf16.mxu0 0
    %869 = vmatpush1.bf16.msra.mxu0 0
    %870 = vmatprep.subr.bf16.mxu0 0
    %871 = vmatpush1.bf16.msra.mxu0 0
    %872 = vmatprep.subr.bf16.mxu0 0
    %873 = vmatpush1.bf16.msra.mxu0 0
    %874 = vmatprep.subr.bf16.mxu0 %v392
    %875 = vmatpush1.bf16.msra.mxu0 %v391
    %876 = vmatprep.subr.bf16.mxu0 %v390
    %877 = vmatpush1.bf16.msra.mxu0 %v389
    %878 = vmatprep.subr.bf16.mxu0 %v388
    %879 = vmatpush1.bf16.msra.mxu0 %v387
    %880 = vmatprep.subr.bf16.mxu0 %v386
    %881 = vmatpush1.bf16.msra.mxu0 %v385
    %882 = vmatprep.subr.bf16.mxu0 0
    %883 = vmatpush2.bf16.msra.mxu0 0
    %884 = vmatprep.subr.bf16.mxu0 0
    %885 = vmatpush2.bf16.msra.mxu0 0
    %886 = vmatprep.subr.bf16.mxu0 0
    %887 = vmatpush2.bf16.msra.mxu0 0
    %888 = vmatprep.subr.bf16.mxu0 0
    %889 = vmatpush2.bf16.msra.mxu0 0
    %890 = vmatprep.subr.bf16.mxu0 0
    %891 = vmatpush2.bf16.msra.mxu0 0
    %892 = vmatprep.subr.bf16.mxu0 0
    %893 = vmatpush2.bf16.msra.mxu0 0
    %894 = vmatprep.subr.bf16.mxu0 0
    %895 = vmatpush2.bf16.msra.mxu0 0
    %896 = vmatprep.subr.bf16.mxu0 0
    %897 = vmatpush2.bf16.msra.mxu0 0
    %898 = vmatprep.mubr.bf16.mxu0 0
    %899 = vmatmul.mubr.bf16.gmra.mxu0 %v864
    %v900 = vpop.f32.mrf.mxu0
    %v901 = vadd.f32 0.0, %v900
    %v902 = vpop.f32.mrf.mxu0
    %v903 = vadd.f32 0.0, %v902
    %v904 = vpop.f32.mrf.mxu0
    %v905 = vpop.f32.mrf.mxu0
    %906 = vdwg.mxu0
    %v907 = vadd.f32 %v860, %v901
    %v908 = vadd.f32 %v861, %v903
    %v909 = vxor.u32 %v907, 2147483648
    %v910 = vxor.u32 %v908, 2147483648
    %v911 = vmul.f32 %v909, 1.442695
    %v912 = vpow.pop %v911
    %v913 = vmul.f32 %v910, 1.442695
    %v914 = vpow.pop %v913
    %v915 = vadd.f32 %v912, 1.0
    %v916 = vadd.f32 %v914, 1.0
    %v917 = vrcp.pop %v915
    %v918 = vmul.f32 1.0, %v917
    %v919 = vrcp.pop %v916
    %v920 = vmul.f32 1.0, %v919
    %v921 = vtanh.pop %v908
    %923 = vrot.lane.b32.xlu0 %v854, 64
    %v924 = vpop.permute.xlu0 %923
    %v926 = vmul.f32 %v918, %v924
    %928 = vrot.lane.b32.xlu0 %v921, 64
    %v929 = vpop.permute.xlu0 %928
    %v931 = vmul.f32 %v918, %v929
    %933 = vrot.lane.b32.xlu0 %v931, 64
    %v934 = vpop.permute.xlu0 %933
    %v936 = vadd.f32 %v926, %v934
    %v937 = vtanh.pop %v936
    %939 = vrot.lane.b32.xlu0 %v937, 64
    %v940 = vpop.permute.xlu0 %939
    %v942 = vmul.f32 %v920, %v940
    %944 = vrot.lane.b32.xlu0 %v936, 64
    %v945 = vpop.permute.xlu0 %944
    %v947 = vsel %vm356, %v945, %v854
    %v948 = vsel %vm356, %v942, %v855
    %v949 = vsel %vm356, %v942, 0.0
    %v950 = vpack.c.bf16 %v949, %v949
    %951 = vst.msk [vmem:[#allocation3 + $0x14] sm:$0xf] %vm485, %v950
    %952 = vst.msk [vmem:[#allocation3 + $0x8] sm:$0xf] %vm487, %v950
    %v953 = vld [vmem:[#allocation2 + $0x60] sm:$0xff]
    %v954 = vld [vmem:[#allocation2 + $0x68] sm:$0xff]
    %v955 = vpack.c.bf16 %v948, %v948
    %v957 = vsel %vm401, %v955, 0
    %959 = vmatprep.subr.bf16.mxu0 0
    %960 = vmatpush1.bf16.msra.mxu0 0
    %961 = vmatprep.subr.bf16.mxu0 0
    %962 = vmatpush1.bf16.msra.mxu0 0
    %963 = vmatprep.subr.bf16.mxu0 0
    %964 = vmatpush1.bf16.msra.mxu0 0
    %965 = vmatprep.subr.bf16.mxu0 0
    %966 = vmatpush1.bf16.msra.mxu0 0
    %967 = vmatprep.subr.bf16.mxu0 %v392
    %968 = vmatpush1.bf16.msra.mxu0 %v391
    %969 = vmatprep.subr.bf16.mxu0 %v390
    %970 = vmatpush1.bf16.msra.mxu0 %v389
    %971 = vmatprep.subr.bf16.mxu0 %v388
    %972 = vmatpush1.bf16.msra.mxu0 %v387
    %973 = vmatprep.subr.bf16.mxu0 %v386
    %974 = vmatpush1.bf16.msra.mxu0 %v385
    %975 = vmatprep.subr.bf16.mxu0 0
    %976 = vmatpush2.bf16.msra.mxu0 0
    %977 = vmatprep.subr.bf16.mxu0 0
    %978 = vmatpush2.bf16.msra.mxu0 0
    %979 = vmatprep.subr.bf16.mxu0 0
    %980 = vmatpush2.bf16.msra.mxu0 0
    %981 = vmatprep.subr.bf16.mxu0 0
    %982 = vmatpush2.bf16.msra.mxu0 0
    %983 = vmatprep.subr.bf16.mxu0 0
    %984 = vmatpush2.bf16.msra.mxu0 0
    %985 = vmatprep.subr.bf16.mxu0 0
    %986 = vmatpush2.bf16.msra.mxu0 0
    %987 = vmatprep.subr.bf16.mxu0 0
    %988 = vmatpush2.bf16.msra.mxu0 0
    %989 = vmatprep.subr.bf16.mxu0 0
    %990 = vmatpush2.bf16.msra.mxu0 0
    %991 = vmatprep.mubr.bf16.mxu0 0
    %992 = vmatmul.mubr.bf16.gmra.mxu0 %v957
    %v993 = vpop.f32.mrf.mxu0
    %v994 = vadd.f32 0.0, %v993
    %v995 = vpop.f32.mrf.mxu0
    %v996 = vadd.f32 0.0, %v995
    %v997 = vpop.f32.mrf.mxu0
    %v998 = vpop.f32.mrf.mxu0
    %999 = vdwg.mxu0
    %v1000 = vadd.f32 %v953, %v994
    %v1001 = vadd.f32 %v954, %v996
    %v1002 = vxor.u32 %v1000, 2147483648
    %v1003 = vxor.u32 %v1001, 2147483648
    %v1004 = vmul.f32 %v1002, 1.442695
    %v1005 = vpow.pop %v1004
    %v1006 = vmul.f32 %v1003, 1.442695
    %v1007 = vpow.pop %v1006
    %v1008 = vadd.f32 %v1005, 1.0
    %v1009 = vadd.f32 %v1007, 1.0
    %v1010 = vrcp.pop %v1008
    %v1011 = vmul.f32 1.0, %v1010
    %v1012 = vrcp.pop %v1009
    %v1013 = vmul.f32 1.0, %v1012
    %v1014 = vtanh.pop %v1001
    %1016 = vrot.lane.b32.xlu0 %v947, 64
    %v1017 = vpop.permute.xlu0 %1016
    %v1019 = vmul.f32 %v1011, %v1017
    %1021 = vrot.lane.b32.xlu0 %v1014, 64
    %v1022 = vpop.permute.xlu0 %1021
    %v1024 = vmul.f32 %v1011, %v1022
    %1026 = vrot.lane.b32.xlu0 %v1024, 64
    %v1027 = vpop.permute.xlu0 %1026
    %v1029 = vadd.f32 %v1019, %v1027
    %v1030 = vtanh.pop %v1029
    %1032 = vrot.lane.b32.xlu0 %v1030, 64
    %v1033 = vpop.permute.xlu0 %1032
    %v1035 = vmul.f32 %v1013, %v1033
    %1037 = vrot.lane.b32.xlu0 %v1029, 64
    %v1038 = vpop.permute.xlu0 %1037
    %v1040 = vsel %vm357, %v1038, %v947
    %v1041 = vsel %vm357, %v1035, %v948
    %v1042 = vsel %vm357, %v1035, 0.0
    %v1043 = vpack.c.bf16 %v1042, %v1042
    %1044 = vst.msk [vmem:[#allocation3 + $0x18] sm:$0xf] %vm485, %v1043
    %1045 = vst.msk [vmem:[#allocation3 + $0x4] sm:$0xf] %vm487, %v1043
    %v1046 = vld [vmem:[#allocation2 + $0x70] sm:$0xff]
    %v1047 = vld [vmem:[#allocation2 + $0x78] sm:$0xff]
    %v1048 = vpack.c.bf16 %v1041, %v1041
    %v1050 = vsel %vm401, %v1048, 0
    %1052 = vmatprep.subr.bf16.mxu0 0
    %1053 = vmatpush1.bf16.msra.mxu0 0
    %1054 = vmatprep.subr.bf16.mxu0 0
    %1055 = vmatpush1.bf16.msra.mxu0 0
    %1056 = vmatprep.subr.bf16.mxu0 0
    %1057 = vmatpush1.bf16.msra.mxu0 0
    %1058 = vmatprep.subr.bf16.mxu0 0
    %1059 = vmatpush1.bf16.msra.mxu0 0
    %1060 = vmatprep.subr.bf16.mxu0 %v392
    %1061 = vmatpush1.bf16.msra.mxu0 %v391
    %1062 = vmatprep.subr.bf16.mxu0 %v390
    %1063 = vmatpush1.bf16.msra.mxu0 %v389
    %1064 = vmatprep.subr.bf16.mxu0 %v388
    %1065 = vmatpush1.bf16.msra.mxu0 %v387
    %1066 = vmatprep.subr.bf16.mxu0 %v386
    %1067 = vmatpush1.bf16.msra.mxu0 %v385
    %1068 = vmatprep.subr.bf16.mxu0 0
    %1069 = vmatpush2.bf16.msra.mxu0 0
    %1070 = vmatprep.subr.bf16.mxu0 0
    %1071 = vmatpush2.bf16.msra.mxu0 0
    %1072 = vmatprep.subr.bf16.mxu0 0
    %1073 = vmatpush2.bf16.msra.mxu0 0
    %1074 = vmatprep.subr.bf16.mxu0 0
    %1075 = vmatpush2.bf16.msra.mxu0 0
    %1076 = vmatprep.subr.bf16.mxu0 0
    %1077 = vmatpush2.bf16.msra.mxu0 0
    %1078 = vmatprep.subr.bf16.mxu0 0
    %1079 = vmatpush2.bf16.msra.mxu0 0
    %1080 = vmatprep.subr.bf16.mxu0 0
    %1081 = vmatpush2.bf16.msra.mxu0 0
    %1082 = vmatprep.subr.bf16.mxu0 0
    %1083 = vmatpush2.bf16.msra.mxu0 0
    %1084 = vmatprep.mubr.bf16.mxu0 0
    %1085 = vmatmul.mubr.bf16.gmra.mxu0 %v1050
    %v1086 = vpop.f32.mrf.mxu0
    %v1087 = vadd.f32 0.0, %v1086
    %v1088 = vpop.f32.mrf.mxu0
    %v1089 = vadd.f32 0.0, %v1088
    %v1090 = vpop.f32.mrf.mxu0
    %v1091 = vpop.f32.mrf.mxu0
    %1092 = vdwg.mxu0
    %v1093 = vadd.f32 %v1046, %v1087
    %v1094 = vadd.f32 %v1047, %v1089
    %v1095 = vxor.u32 %v1093, 2147483648
    %v1096 = vxor.u32 %v1094, 2147483648
    %v1097 = vmul.f32 %v1095, 1.442695
    %v1098 = vpow.pop %v1097
    %v1099 = vmul.f32 %v1096, 1.442695
    %v1100 = vpow.pop %v1099
    %v1101 = vadd.f32 %v1098, 1.0
    %v1102 = vadd.f32 %v1100, 1.0
    %v1103 = vrcp.pop %v1101
    %v1104 = vmul.f32 1.0, %v1103
    %v1105 = vrcp.pop %v1102
    %v1106 = vmul.f32 1.0, %v1105
    %v1107 = vtanh.pop %v1094
    %1109 = vrot.lane.b32.xlu0 %v1040, 64
    %v1110 = vpop.permute.xlu0 %1109
    %v1112 = vmul.f32 %v1104, %v1110
    %1114 = vrot.lane.b32.xlu0 %v1107, 64
    %v1115 = vpop.permute.xlu0 %1114
    %v1117 = vmul.f32 %v1104, %v1115
    %1119 = vrot.lane.b32.xlu0 %v1117, 64
    %v1120 = vpop.permute.xlu0 %1119
    %v1122 = vadd.f32 %v1112, %v1120
    %v1123 = vtanh.pop %v1122
    %1125 = vrot.lane.b32.xlu0 %v1123, 64
    %v1126 = vpop.permute.xlu0 %1125
    %v1128 = vmul.f32 %v1106, %v1126
    %v1129 = vsel %vm358, %v1128, 0.0
    %v1130 = vpack.c.bf16 %v1129, %v1129
    %1131 = vst.msk [vmem:[#allocation3 + $0x1c] sm:$0xf] %vm485, %v1130
    %1132 = vst.msk [vmem:[#allocation3] sm:$0xf] %vm487, %v1130
    %v1133 = vld [vmem:[#allocation3] sm:$0xf]
    %v1134 = vld [vmem:[#allocation3 + $0x4] sm:$0xf]
    %v1135 = vld [vmem:[#allocation3 + $0x8] sm:$0xf]
    %v1136 = vld [vmem:[#allocation3 + $0xc] sm:$0xf]
    %v1137 = vld [vmem:[#allocation3 + $0x10] sm:$0xf]
    %v1138 = vld [vmem:[#allocation3 + $0x14] sm:$0xf]
    %v1139 = vld [vmem:[#allocation3 + $0x18] sm:$0xf]
    %v1140 = vld [vmem:[#allocation3 + $0x1c] sm:$0xf]
    %v1141 = vld [vmem:[#allocation12] sm:$0xf]
    %v1142 = vld [vmem:[#allocation12 + $0x4] sm:$0xf]
    %v1143 = vld [vmem:[#allocation12 + $0x8] sm:$0xf]
    %v1144 = vld [vmem:[#allocation12 + $0xc] sm:$0xf]
    %v1145 = vld [vmem:[#allocation12 + $0x10] sm:$0xf]
    %v1146 = vld [vmem:[#allocation12 + $0x14] sm:$0xf]
    %v1147 = vld [vmem:[#allocation12 + $0x18] sm:$0xf]
    %v1148 = vld [vmem:[#allocation12 + $0x1c] sm:$0xf]
    %v1149 = vld [vmem:[%s6] sm:$0x1]
    %v1151 = vlaneseq
    %v1152 = vshrl.u32 %v1151, 7
    %v1153 = vsub.s32 0, %v1152
    %v1154 = vrot.slane %v1149, %v1153
    %v1164 = vunpack.c.l.b16 %v1133
    %v1165 = vunpack.c.l.b16 %v1134
    %v1166 = vunpack.c.l.b16 %v1135
    %v1167 = vunpack.c.l.b16 %v1136
    %v1168 = vunpack.c.l.b16 %v1137
    %v1169 = vunpack.c.l.b16 %v1138
    %v1170 = vunpack.c.l.b16 %v1139
    %v1171 = vunpack.c.l.b16 %v1140
    %v1172 = vpack.c.b16 %v1165, %v1164
    %v1173 = vpack.c.b16 %v1167, %v1166
    %v1174 = vpack.c.b16 %v1169, %v1168
    %v1175 = vpack.c.b16 %v1171, %v1170
    %v1184 = vunpack.c.l.b16 %v1141
    %v1185 = vunpack.c.l.b16 %v1142
    %v1186 = vunpack.c.l.b16 %v1143
    %v1187 = vunpack.c.l.b16 %v1144
    %v1188 = vunpack.c.l.b16 %v1145
    %v1189 = vunpack.c.l.b16 %v1146
    %v1190 = vunpack.c.l.b16 %v1147
    %v1191 = vunpack.c.l.b16 %v1148
    %v1192 = vpack.c.b16 %v1185, %v1184
    %v1193 = vpack.c.b16 %v1187, %v1186
    %v1194 = vpack.c.b16 %v1189, %v1188
    %v1195 = vpack.c.b16 %v1191, %v1190
    %v1201 = vsel %vm401, %v1172, 0
    %v1204 = vsel %vm401, %v1173, 0
    %v1207 = vsel %vm401, %v1174, 0
    %v1210 = vsel %vm401, %v1175, 0
    %1212 = vmatprep.subr.bf16.mxu0 0
    %1213 = vmatpush1.bf16.msra.mxu0 0
    %1214 = vmatprep.subr.bf16.mxu0 0
    %1215 = vmatpush1.bf16.msra.mxu0 0
    %1216 = vmatprep.subr.bf16.mxu0 0
    %1217 = vmatpush1.bf16.msra.mxu0 0
    %1218 = vmatprep.subr.bf16.mxu0 0
    %1219 = vmatpush1.bf16.msra.mxu0 0
    %1220 = vmatprep.subr.bf16.mxu0 0
    %1221 = vmatpush1.bf16.msra.mxu0 %v1195
    %1222 = vmatprep.subr.bf16.mxu0 0
    %1223 = vmatpush1.bf16.msra.mxu0 %v1194
    %1224 = vmatprep.subr.bf16.mxu0 0
    %1225 = vmatpush1.bf16.msra.mxu0 %v1193
    %1226 = vmatprep.subr.bf16.mxu0 0
    %1227 = vmatpush1.bf16.msra.mxu0 %v1192
    %1228 = vmatprep.subr.bf16.mxu0 0
    %1229 = vmatpush2.bf16.msra.mxu0 0
    %1230 = vmatprep.subr.bf16.mxu0 0
    %1231 = vmatpush2.bf16.msra.mxu0 0
    %1232 = vmatprep.subr.bf16.mxu0 0
    %1233 = vmatpush2.bf16.msra.mxu0 0
    %1234 = vmatprep.subr.bf16.mxu0 0
    %1235 = vmatpush2.bf16.msra.mxu0 0
    %1236 = vmatprep.subr.bf16.mxu0 0
    %1237 = vmatpush2.bf16.msra.mxu0 0
    %1238 = vmatprep.subr.bf16.mxu0 0
    %1239 = vmatpush2.bf16.msra.mxu0 0
    %1240 = vmatprep.subr.bf16.mxu0 0
    %1241 = vmatpush2.bf16.msra.mxu0 0
    %1242 = vmatprep.subr.bf16.mxu0 0
    %1243 = vmatpush2.bf16.msra.mxu0 0
    %1244 = vmatprep.mubr.bf16.mxu0 0
    %1245 = vmatmul.mubr.bf16.gmra.mxu0 %v1201
    %v1246 = vpop.f32.mrf.mxu0
    %v1247 = vadd.f32 %v1154, %v1246
    %v1248 = vpop.f32.mrf.mxu0
    %v1249 = vpop.f32.mrf.mxu0
    %v1250 = vadd.f32 %v1154, %v1249
    %v1251 = vpop.f32.mrf.mxu0
    %1252 = vmatprep.mubr.bf16.mxu0 0
    %1253 = vmatmul.mubr.bf16.gmra.mxu0 %v1204
    %v1254 = vpop.f32.mrf.mxu0
    %v1255 = vadd.f32 %v1154, %v1254
    %v1256 = vpop.f32.mrf.mxu0
    %v1257 = vpop.f32.mrf.mxu0
    %v1258 = vadd.f32 %v1154, %v1257
    %v1259 = vpop.f32.mrf.mxu0
    %1260 = vmatprep.mubr.bf16.mxu0 0
    %1261 = vmatmul.mubr.bf16.gmra.mxu0 %v1207
    %v1262 = vpop.f32.mrf.mxu0
    %v1263 = vadd.f32 %v1154, %v1262
    %v1264 = vpop.f32.mrf.mxu0
    %v1265 = vpop.f32.mrf.mxu0
    %v1266 = vadd.f32 %v1154, %v1265
    %v1267 = vpop.f32.mrf.mxu0
    %1268 = vmatprep.mubr.bf16.mxu0 0
    %1269 = vmatmul.mubr.bf16.gmra.mxu0 %v1210
    %v1270 = vpop.f32.mrf.mxu0
    %v1271 = vadd.f32 %v1154, %v1270
    %v1272 = vpop.f32.mrf.mxu0
    %v1273 = vpop.f32.mrf.mxu0
    %v1274 = vadd.f32 %v1154, %v1273
    %v1275 = vpop.f32.mrf.mxu0
    %1276 = vdwg.mxu0
    %1277 = vst [vmem:[#allocation13] sm:$0xff] %v1247
    %1278 = vst [vmem:[#allocation13 + $0x8] sm:$0xff] %v1250
    %1279 = vst [vmem:[#allocation13 + $0x10] sm:$0xff] %v1255
    %1280 = vst [vmem:[#allocation13 + $0x18] sm:$0xff] %v1258
    %1281 = vst [vmem:[#allocation13 + $0x20] sm:$0xff] %v1263
    %1282 = vst [vmem:[#allocation13 + $0x28] sm:$0xff] %v1266
    %1283 = vst [vmem:[#allocation13 + $0x30] sm:$0xff] %v1271
    %1284 = vst [vmem:[#allocation13 + $0x38] sm:$0xff] %v1274
    // Predicated region
    $region50: #{tpu_custom_call.1} parent=1 // pred_check
      _
    $region51: #{tpu_custom_call.1} parent=1 // pred_check_branch
      %1286 = sbr.rel (0) target = $region53
    $region52: #{tpu_custom_call.1} parent=1 // pred_region
      %s1288 = ssub.s32 1024, 1024
      %1289 = vsyncadd [#allocation6], %s1288
      %s1290 = sshll.u32 [#allocation13], 4
      %s1291 = int_to_ptr.vmem [resolvable:$true] %s1290
      %1296 = dma.vmem_to_hbm [thread:$0]  %s1291, 1024, %s7, [#allocation6], 128, 128, 8
    $region53: #{tpu_custom_call.1} parent=1 // pred_fallthru
      _
    // Predicated region
    $region54: #{tpu_custom_call.1} parent=1 // pred_check
      _
    $region55: #{tpu_custom_call.1} parent=1 // pred_check_branch
      %1298 = sbr.rel (0) target = $region57
    $region56: #{tpu_custom_call.1} parent=1 // pred_region
      %1299 = dma.done [#allocation6], 1024
    $region57: #{tpu_custom_call.1} parent=1 // pred_fallthru
      _
    %1300 = vsyncpa [#allocation5], 1
    %1301 = vsyncpa [#allocation8], 1
    %1302 = vsyncpa [#allocation11], 1
    %1303 = vsyncpa [#allocation6], 1

</llo_original>
